<compile_context>
chip_gen: v6e
topology: v6e:2x2x1
jax: 0.10.0
libtpu: 0.0.40
codegen_flags: <defaults>
</compile_context>

<pallas_src>
import jax
import jax.numpy as jnp
from jax.experimental import pallas as pl
from jax.experimental.pallas import tpu as pltpu

# ---- problem sizes (small, consistent with the module) ------------------------------
B, S, D = 2, 8, 32          # batch, seq_len, dim_model
H = 4                       # num_head
DH = D // H                 # dim_head
CH = D // DH                # dim_head chunks per row (= H)
HIDDEN = 64                 # feed-forward hidden
G = B * H                   # attention groups after the torch .view()
R = B * S                   # flat rows
M = G * S                   # 64 "head rows" (= R * CH)
EPS = 1e-5
NEG = -1e9                  # additive mask for off-group score entries
INV_N = 1.0 / float(R)      # 1/num_rows for BatchNorm batch statistics


def _vmem_spec():
    return pl.BlockSpec(memory_space=pltpu.MemorySpace.VMEM)


# ---- single fused kernel -------------------------------------------------------------
def encoder_kernel(xf_ref, rep4_ref, s4_ref, wqkv_ref, bqkv_ref, pick24_ref,
                   attn_bias_ref, wo_h_ref, pick32_ref, bo_ref,
                   g1_ref, be1_ref, w1_ref, b1_ref, w2_ref, b2_ref, g2_ref, be2_ref,
                   out_ref):
    f32 = jnp.float32
    x = xf_ref[...]                                                     # (16, 32)

    # ---- QKV projection with the head .view() folded into matmuls -------------------
    # qkv_flat[r, 24j+c] = [Q|K|V] chunk j of row r (interleaved weights, scale folded).
    qkv_flat = jnp.dot(x, wqkv_ref[...], preferred_element_type=f32)    # (16, 96)
    # replicate each row 4x (MXU M axis carries all B*H*S head-rows) and pick the row's
    # own 24-lane [q|k|v] chunk: head row m = 4r + j  ==  8g + p (torch view order).
    qkv = jnp.dot(rep4_ref[...], qkv_flat, preferred_element_type=f32) + bqkv_ref[...]  # (64, 96)
    qkv = qkv * pick24_ref[...]
    qkvh = qkv[:, 0:24] + qkv[:, 24:48] + qkv[:, 48:72] + qkv[:, 72:96]  # (64, 24)
    q = qkvh[:, 0:DH]                                                    # (64, 8), pre-scaled
    k = qkvh[:, DH:2 * DH]
    v = qkvh[:, 2 * DH:3 * DH]

    # ---- block-diagonal attention: all B*H groups in one (64,64) score matrix --------
    scores = jax.lax.dot_general(q, k, (((1,), (1,)), ((), ())),
                                 preferred_element_type=f32)             # (64, 64)
    scores = scores + attn_bias_ref[...]                                 # off-group -> -1e9
    scores = scores - jnp.max(scores, axis=-1, keepdims=True)            # stable softmax
    e = jnp.exp(scores)                                                  # off-group -> 0.0
    probs = e * pl.reciprocal(jnp.sum(e, axis=-1, keepdims=True), approx=True)
    ctx = jnp.dot(probs, v, preferred_element_type=f32)                  # (64, 8)

    # ---- output projection with the reverse .view() folded in -----------------------
    # p[m, 32j+n] = ctx[m,:] . Wo[8j:8j+8, n]; pick block j = m%4, sum lane blocks,
    # then sum the 4 head rows of each flat row with the 0/1 matrix s4.
    p = jnp.dot(ctx, wo_h_ref[...], preferred_element_type=f32) * pick32_ref[...]  # (64, 128)
    ctxw = p[:, 0:32] + p[:, 32:64] + p[:, 64:96] + p[:, 96:128]         # (64, 32)
    attn_out = (jnp.dot(s4_ref[...], ctxw, preferred_element_type=f32)
                + bo_ref[...] + x)                                       # (16, 32)

    # ---- BatchNorm1d #1 (training stats, one-pass sum / sum-of-squares) -------------
    mean1 = jnp.sum(attn_out, axis=0, keepdims=True) * INV_N
    msq1 = jnp.sum(attn_out * attn_out, axis=0, keepdims=True) * INV_N
    var1 = msq1 - mean1 * mean1
    out1 = (attn_out - mean1) * jax.lax.rsqrt(var1 + EPS) * g1_ref[...] + be1_ref[...]

    # ---- Position_wise_Feed_Forward: fc1 -> relu -> fc2 (+dropout=id) + residual + BN
    h = jnp.maximum(
        jnp.dot(out1, w1_ref[...], preferred_element_type=f32) + b1_ref[...], 0.0)
    f = jnp.dot(h, w2_ref[...], preferred_element_type=f32) + b2_ref[...] + out1
    mean2 = jnp.sum(f, axis=0, keepdims=True) * INV_N
    msq2 = jnp.sum(f * f, axis=0, keepdims=True) * INV_N
    var2 = msq2 - mean2 * mean2
    out_ref[...] = (f - mean2) * jax.lax.rsqrt(var2 + EPS) * g2_ref[...] + be2_ref[...]


# ---- wrapper -------------------------------------------------------------------------
@jax.jit
def encoder_forward(x, kp):
    xf = x.reshape(R, D)
    out = pl.pallas_call(
        encoder_kernel,
        out_shape=jax.ShapeDtypeStruct((R, D), jnp.float32),
        in_specs=[_vmem_spec()] * 18,
        out_specs=_vmem_spec(),
    )(xf, kp["rep4"], kp["s4"], kp["wqkv_i"], kp["bqkv_i"], kp["pick24"],
      kp["attn_bias"], kp["wo_h"], kp["pick32"], kp["bo"],
      kp["g1"], kp["be1"], kp["w1"], kp["b1"], kp["w2"], kp["b2"],
      kp["g2"], kp["be2"])
    return out.reshape(B, S, D)


# ---- pure-JAX reference for correctness check ----------------------------------------
def ref_forward(x, p):
    hp = jax.lax.Precision.HIGHEST
    xf = x.reshape(R, D)
    Q = (jnp.dot(xf, p["wq"], precision=hp) + p["bq"]).reshape(G, S, DH)
    K = (jnp.dot(xf, p["wk"], precision=hp) + p["bk"]).reshape(G, S, DH)
    V = (jnp.dot(xf, p["wv"], precision=hp) + p["bv"]).reshape(G, S, DH)
    scale = float(DH) ** (-0.5)
    att = jnp.einsum("gqd,gkd->gqk", Q, K, precision=hp) * scale
    att = jax.nn.softmax(att, axis=-1)
    ctx = jnp.einsum("gqk,gkd->gqd", att, V, precision=hp).reshape(R, D)

    out = jnp.dot(ctx, p["wo"], precision=hp) + p["bo"] + xf
    m = out.mean(0, keepdims=True)
    v = ((out - m) ** 2).mean(0, keepdims=True)
    out = (out - m) / jnp.sqrt(v + EPS) * p["g1"] + p["be1"]

    h = jnp.maximum(jnp.dot(out, p["w1"], precision=hp) + p["b1"], 0.0)
    f = jnp.dot(h, p["w2"], precision=hp) + p["b2"] + out
    m2 = f.mean(0, keepdims=True)
    v2 = ((f - m2) ** 2).mean(0, keepdims=True)
    f = (f - m2) / jnp.sqrt(v2 + EPS) * p["g2"] + p["be2"]
    return f.reshape(B, S, D)


def init_params(key):
    ks = jax.random.split(key, 16)

    def lin(kw, kb, fan_in, fan_out):
        bound = 1.0 / (fan_in ** 0.5)
        w = jax.random.uniform(kw, (fan_in, fan_out), jnp.float32, -bound, bound)
        b = jax.random.uniform(kb, (1, fan_out), jnp.float32, -bound, bound)
        return w, b

    p = {}
    p["wq"], p["bq"] = lin(ks[0], ks[1], D, D)
    p["wk"], p["bk"] = lin(ks[2], ks[3], D, D)
    p["wv"], p["bv"] = lin(ks[4], ks[5], D, D)
    p["wo"], p["bo"] = lin(ks[6], ks[7], D, D)
    p["w1"], p["b1"] = lin(ks[8], ks[9], D, HIDDEN)
    p["w2"], p["b2"] = lin(ks[10], ks[11], HIDDEN, D)
    p["g1"] = 1.0 + 0.1 * jax.random.normal(ks[12], (1, D), jnp.float32)
    p["be1"] = 0.1 * jax.random.normal(ks[13], (1, D), jnp.float32)
    p["g2"] = 1.0 + 0.1 * jax.random.normal(ks[14], (1, D), jnp.float32)
    p["be2"] = 0.1 * jax.random.normal(ks[15], (1, D), jnp.float32)
    return p


def prepare_params(p):
    """One-time parameter prep (outside the jit hot path).

    Head-row m = 4r + j (r = flat row, j = dim_head chunk) equals 8g + p of the torch
    `.view(batch*num_head, -1, dim_head)` order, so the regroup is expressed with:
      * wqkv_i / bqkv_i : column-interleaved [Wq_j|Wk_j|Wv_j] per chunk j, scale folded into Q
      * rep4 / s4       : 0/1 row-replicate / row-sum matrices
      * pick24 / pick32 : 0/1 "own-chunk" lane masks
      * wo_h            : Wo row-blocks stacked horizontally (for the folded un-mix)
      * attn_bias       : additive block-diagonal mask (0 in-group, -1e9 off-group)
    """
    scale = float(DH) ** (-0.5)
    q = {k: p[k] for k in ("bo", "g1", "be1", "w1", "b1", "w2", "b2", "g2", "be2")}

    wq_s, bq_s = p["wq"] * scale, p["bq"] * scale
    w_cols, b_cols = [], []
    for j in range(CH):
        sl = slice(DH * j, DH * (j + 1))
        w_cols += [wq_s[:, sl], p["wk"][:, sl], p["wv"][:, sl]]
        b_cols += [bq_s[:, sl], p["bk"][:, sl], p["bv"][:, sl]]
    q["wqkv_i"] = jnp.concatenate(w_cols, axis=1)                        # (D, 3D) = (32, 96)
    q["bqkv_i"] = jnp.concatenate(b_cols, axis=1)                        # (1, 96)
    q["wo_h"] = jnp.concatenate([p["wo"][DH * j:DH * (j + 1), :] for j in range(CH)],
                                axis=1)                                  # (DH, CH*D) = (8, 128)

    m = jnp.arange(M)
    r = jnp.arange(R)
    q["s4"] = (r[:, None] == (m[None, :] // CH)).astype(jnp.float32)    # (16, 64)
    q["rep4"] = q["s4"].T                                                # (64, 16)
    q["pick24"] = (jnp.arange(3 * D)[None, :] // (3 * DH)
                   == (m[:, None] % CH)).astype(jnp.float32)             # (64, 96)
    q["pick32"] = (jnp.arange(CH * D)[None, :] // D
                   == (m[:, None] % CH)).astype(jnp.float32)             # (64, 128)
    q["attn_bias"] = jnp.where((m[:, None] // S) == (m[None, :] // S),
                               0.0, NEG).astype(jnp.float32)             # (64, 64)
    return q


if __name__ == "__main__":
    key = jax.random.PRNGKey(0)
    k_x, k_p = jax.random.split(key)
    x = jax.random.normal(k_x, (B, S, D), jnp.float32)
    params = init_params(k_p)
    kparams = jax.tree_util.tree_map(jax.block_until_ready, prepare_params(params))

    out = encoder_forward(x, kparams)
    out = jax.block_until_ready(out)

    ref = ref_forward(x, params)
    assert out.shape == (B, S, D), out.shape
    assert jnp.allclose(out, ref, rtol=2e-3, atol=2e-3), float(jnp.max(jnp.abs(out - ref)))

    print("KERNEL_OK")
</pallas_src>

<mosaic_0001>
module attributes {stable_mosaic.version = 11 : i64} {
  func.func @encoder_kernel(%arg0: memref<16x32xf32, #tpu.memory_space<vmem>>, %arg1: memref<64x16xf32, #tpu.memory_space<vmem>>, %arg2: memref<16x64xf32, #tpu.memory_space<vmem>>, %arg3: memref<32x96xf32, #tpu.memory_space<vmem>>, %arg4: memref<1x96xf32, #tpu.memory_space<vmem>>, %arg5: memref<64x96xf32, #tpu.memory_space<vmem>>, %arg6: memref<64x64xf32, #tpu.memory_space<vmem>>, %arg7: memref<8x128xf32, #tpu.memory_space<vmem>>, %arg8: memref<64x128xf32, #tpu.memory_space<vmem>>, %arg9: memref<1x32xf32, #tpu.memory_space<vmem>>, %arg10: memref<1x32xf32, #tpu.memory_space<vmem>>, %arg11: memref<1x32xf32, #tpu.memory_space<vmem>>, %arg12: memref<32x64xf32, #tpu.memory_space<vmem>>, %arg13: memref<1x64xf32, #tpu.memory_space<vmem>>, %arg14: memref<64x32xf32, #tpu.memory_space<vmem>>, %arg15: memref<1x32xf32, #tpu.memory_space<vmem>>, %arg16: memref<1x32xf32, #tpu.memory_space<vmem>>, %arg17: memref<1x32xf32, #tpu.memory_space<vmem>>, %arg18: memref<16x32xf32, #tpu.memory_space<vmem>>) attributes {dimension_semantics = [], scalar_prefetch = 0 : i64, scratch_operands = 0 : i64, tpu.core_type = #tpu.core_type<tc>} {
    %c0 = arith.constant 0 : index
    %c0_0 = arith.constant 0 : index
    %0 = vector.load %arg0[%c0, %c0_0] : memref<16x32xf32, #tpu.memory_space<vmem>>, vector<16x32xf32>
    %c0_1 = arith.constant 0 : index
    %c0_2 = arith.constant 0 : index
    %1 = vector.load %arg3[%c0_1, %c0_2] : memref<32x96xf32, #tpu.memory_space<vmem>>, vector<32x96xf32>
    %cst = arith.constant dense<0.000000e+00> : vector<16x96xf32>
    %2 = tpu.matmul %0, %1, %cst {dimension_numbers = #tpu.dot_dimension_numbers<[1], [0], [0], [1], [0, 0, 1, 1], [], []>} : vector<16x32xf32>, vector<32x96xf32>, vector<16x96xf32> -> vector<16x96xf32>
    %c0_3 = arith.constant 0 : index
    %c0_4 = arith.constant 0 : index
    %3 = vector.load %arg1[%c0_3, %c0_4] : memref<64x16xf32, #tpu.memory_space<vmem>>, vector<64x16xf32>
    %cst_5 = arith.constant dense<0.000000e+00> : vector<64x96xf32>
    %4 = tpu.matmul %3, %2, %cst_5 {dimension_numbers = #tpu.dot_dimension_numbers<[1], [0], [0], [1], [0, 0, 1, 1], [], []>} : vector<64x16xf32>, vector<16x96xf32>, vector<64x96xf32> -> vector<64x96xf32>
    %c0_6 = arith.constant 0 : index
    %c0_7 = arith.constant 0 : index
    %5 = vector.load %arg4[%c0_6, %c0_7] : memref<1x96xf32, #tpu.memory_space<vmem>>, vector<1x96xf32>
    %6 = vector.broadcast %5 : vector<1x96xf32> to vector<64x96xf32>
    %7 = arith.addf %4, %6 : vector<64x96xf32>
    %c0_8 = arith.constant 0 : index
    %c0_9 = arith.constant 0 : index
    %8 = vector.load %arg5[%c0_8, %c0_9] : memref<64x96xf32, #tpu.memory_space<vmem>>, vector<64x96xf32>
    %9 = arith.mulf %7, %8 : vector<64x96xf32>
    %10 = vector.extract_strided_slice %9 {offsets = [0, 0], sizes = [64, 24], strides = [1, 1]} : vector<64x96xf32> to vector<64x24xf32>
    %11 = vector.extract_strided_slice %9 {offsets = [0, 24], sizes = [64, 24], strides = [1, 1]} : vector<64x96xf32> to vector<64x24xf32>
    %12 = arith.addf %10, %11 : vector<64x24xf32>
    %13 = vector.extract_strided_slice %9 {offsets = [0, 48], sizes = [64, 24], strides = [1, 1]} : vector<64x96xf32> to vector<64x24xf32>
    %14 = arith.addf %12, %13 : vector<64x24xf32>
    %15 = vector.extract_strided_slice %9 {offsets = [0, 72], sizes = [64, 24], strides = [1, 1]} : vector<64x96xf32> to vector<64x24xf32>
    %16 = arith.addf %14, %15 : vector<64x24xf32>
    %17 = vector.extract_strided_slice %16 {offsets = [0, 0], sizes = [64, 8], strides = [1, 1]} : vector<64x24xf32> to vector<64x8xf32>
    %18 = vector.extract_strided_slice %16 {offsets = [0, 8], sizes = [64, 8], strides = [1, 1]} : vector<64x24xf32> to vector<64x8xf32>
    %19 = vector.extract_strided_slice %16 {offsets = [0, 16], sizes = [64, 8], strides = [1, 1]} : vector<64x24xf32> to vector<64x8xf32>
    %cst_10 = arith.constant dense<0.000000e+00> : vector<64x64xf32>
    %20 = tpu.matmul %17, %18, %cst_10 {dimension_numbers = #tpu.dot_dimension_numbers<[1], [1], [0], [0], [0, 0, 1, 0], [], []>} : vector<64x8xf32>, vector<64x8xf32>, vector<64x64xf32> -> vector<64x64xf32>
    %c0_11 = arith.constant 0 : index
    %c0_12 = arith.constant 0 : index
    %21 = vector.load %arg6[%c0_11, %c0_12] : memref<64x64xf32, #tpu.memory_space<vmem>>, vector<64x64xf32>
    %22 = arith.addf %20, %21 : vector<64x64xf32>
    %cst_13 = arith.constant dense<0xFF800000> : vector<64xf32>
    %23 = vector.multi_reduction <maximumf>, %22, %cst_13 [1] : vector<64x64xf32> to vector<64xf32>
    %24 = vector.shape_cast %23 : vector<64xf32> to vector<64x1xf32>
    %25 = vector.broadcast %24 : vector<64x1xf32> to vector<64x64xf32>
    %26 = arith.subf %22, %25 : vector<64x64xf32>
    %27 = math.exp %26 : vector<64x64xf32>
    %cst_14 = arith.constant dense<0.000000e+00> : vector<64xf32>
    %28 = vector.multi_reduction <add>, %27, %cst_14 [1] : vector<64x64xf32> to vector<64xf32>
    %29 = vector.shape_cast %28 : vector<64xf32> to vector<64x1xf32>
    %30 = tpu.reciprocal %29 {approx = true} : vector<64x1xf32> -> vector<64x1xf32>
    %31 = vector.broadcast %30 : vector<64x1xf32> to vector<64x64xf32>
    %32 = arith.mulf %27, %31 : vector<64x64xf32>
    %cst_15 = arith.constant dense<0.000000e+00> : vector<64x8xf32>
    %33 = tpu.matmul %32, %19, %cst_15 {dimension_numbers = #tpu.dot_dimension_numbers<[1], [0], [0], [1], [0, 0, 1, 1], [], []>} : vector<64x64xf32>, vector<64x8xf32>, vector<64x8xf32> -> vector<64x8xf32>
    %c0_16 = arith.constant 0 : index
    %c0_17 = arith.constant 0 : index
    %34 = vector.load %arg7[%c0_16, %c0_17] : memref<8x128xf32, #tpu.memory_space<vmem>>, vector<8x128xf32>
    %cst_18 = arith.constant dense<0.000000e+00> : vector<64x128xf32>
    %35 = tpu.matmul %33, %34, %cst_18 {dimension_numbers = #tpu.dot_dimension_numbers<[1], [0], [0], [1], [0, 0, 1, 1], [], []>} : vector<64x8xf32>, vector<8x128xf32>, vector<64x128xf32> -> vector<64x128xf32>
    %c0_19 = arith.constant 0 : index
    %c0_20 = arith.constant 0 : index
    %36 = vector.load %arg8[%c0_19, %c0_20] : memref<64x128xf32, #tpu.memory_space<vmem>>, vector<64x128xf32>
    %37 = arith.mulf %35, %36 : vector<64x128xf32>
    %38 = vector.extract_strided_slice %37 {offsets = [0, 0], sizes = [64, 32], strides = [1, 1]} : vector<64x128xf32> to vector<64x32xf32>
    %39 = vector.extract_strided_slice %37 {offsets = [0, 32], sizes = [64, 32], strides = [1, 1]} : vector<64x128xf32> to vector<64x32xf32>
    %40 = arith.addf %38, %39 : vector<64x32xf32>
    %41 = vector.extract_strided_slice %37 {offsets = [0, 64], sizes = [64, 32], strides = [1, 1]} : vector<64x128xf32> to vector<64x32xf32>
    %42 = arith.addf %40, %41 : vector<64x32xf32>
    %43 = vector.extract_strided_slice %37 {offsets = [0, 96], sizes = [64, 32], strides = [1, 1]} : vector<64x128xf32> to vector<64x32xf32>
    %44 = arith.addf %42, %43 : vector<64x32xf32>
    %c0_21 = arith.constant 0 : index
    %c0_22 = arith.constant 0 : index
    %45 = vector.load %arg2[%c0_21, %c0_22] : memref<16x64xf32, #tpu.memory_space<vmem>>, vector<16x64xf32>
    %cst_23 = arith.constant dense<0.000000e+00> : vector<16x32xf32>
    %46 = tpu.matmul %45, %44, %cst_23 {dimension_numbers = #tpu.dot_dimension_numbers<[1], [0], [0], [1], [0, 0, 1, 1], [], []>} : vector<16x64xf32>, vector<64x32xf32>, vector<16x32xf32> -> vector<16x32xf32>
    %c0_24 = arith.constant 0 : index
    %c0_25 = arith.constant 0 : index
    %47 = vector.load %arg9[%c0_24, %c0_25] : memref<1x32xf32, #tpu.memory_space<vmem>>, vector<1x32xf32>
    %48 = vector.broadcast %47 : vector<1x32xf32> to vector<16x32xf32>
    %49 = arith.addf %46, %48 : vector<16x32xf32>
    %50 = arith.addf %49, %0 : vector<16x32xf32>
    %cst_26 = arith.constant dense<0.000000e+00> : vector<32xf32>
    %51 = vector.multi_reduction <add>, %50, %cst_26 [0] : vector<16x32xf32> to vector<32xf32>
    %52 = vector.shape_cast %51 : vector<32xf32> to vector<1x32xf32>
    %cst_27 = arith.constant 6.250000e-02 : f32
    %53 = vector.broadcast %cst_27 : f32 to vector<1x32xf32>
    %54 = arith.mulf %52, %53 : vector<1x32xf32>
    %55 = arith.mulf %50, %50 : vector<16x32xf32>
    %cst_28 = arith.constant dense<0.000000e+00> : vector<32xf32>
    %56 = vector.multi_reduction <add>, %55, %cst_28 [0] : vector<16x32xf32> to vector<32xf32>
    %57 = vector.shape_cast %56 : vector<32xf32> to vector<1x32xf32>
    %cst_29 = arith.constant 6.250000e-02 : f32
    %58 = vector.broadcast %cst_29 : f32 to vector<1x32xf32>
    %59 = arith.mulf %57, %58 : vector<1x32xf32>
    %60 = arith.mulf %54, %54 : vector<1x32xf32>
    %61 = arith.subf %59, %60 : vector<1x32xf32>
    %62 = vector.broadcast %54 : vector<1x32xf32> to vector<16x32xf32>
    %63 = arith.subf %50, %62 : vector<16x32xf32>
    %cst_30 = arith.constant 9.99999974E-6 : f32
    %64 = vector.broadcast %cst_30 : f32 to vector<1x32xf32>
    %65 = arith.addf %61, %64 : vector<1x32xf32>
    %66 = math.rsqrt %65 : vector<1x32xf32>
    %67 = vector.broadcast %66 : vector<1x32xf32> to vector<16x32xf32>
    %68 = arith.mulf %63, %67 : vector<16x32xf32>
    %c0_31 = arith.constant 0 : index
    %c0_32 = arith.constant 0 : index
    %69 = vector.load %arg10[%c0_31, %c0_32] : memref<1x32xf32, #tpu.memory_space<vmem>>, vector<1x32xf32>
    %70 = vector.broadcast %69 : vector<1x32xf32> to vector<16x32xf32>
    %71 = arith.mulf %68, %70 : vector<16x32xf32>
    %c0_33 = arith.constant 0 : index
    %c0_34 = arith.constant 0 : index
    %72 = vector.load %arg11[%c0_33, %c0_34] : memref<1x32xf32, #tpu.memory_space<vmem>>, vector<1x32xf32>
    %73 = vector.broadcast %72 : vector<1x32xf32> to vector<16x32xf32>
    %74 = arith.addf %71, %73 : vector<16x32xf32>
    %c0_35 = arith.constant 0 : index
    %c0_36 = arith.constant 0 : index
    %75 = vector.load %arg12[%c0_35, %c0_36] : memref<32x64xf32, #tpu.memory_space<vmem>>, vector<32x64xf32>
    %cst_37 = arith.constant dense<0.000000e+00> : vector<16x64xf32>
    %76 = tpu.matmul %74, %75, %cst_37 {dimension_numbers = #tpu.dot_dimension_numbers<[1], [0], [0], [1], [0, 0, 1, 1], [], []>} : vector<16x32xf32>, vector<32x64xf32>, vector<16x64xf32> -> vector<16x64xf32>
    %c0_38 = arith.constant 0 : index
    %c0_39 = arith.constant 0 : index
    %77 = vector.load %arg13[%c0_38, %c0_39] : memref<1x64xf32, #tpu.memory_space<vmem>>, vector<1x64xf32>
    %78 = vector.broadcast %77 : vector<1x64xf32> to vector<16x64xf32>
    %79 = arith.addf %76, %78 : vector<16x64xf32>
    %cst_40 = arith.constant 0.000000e+00 : f32
    %80 = vector.broadcast %cst_40 : f32 to vector<16x64xf32>
    %81 = arith.maximumf %79, %80 : vector<16x64xf32>
    %c0_41 = arith.constant 0 : index
    %c0_42 = arith.constant 0 : index
    %82 = vector.load %arg14[%c0_41, %c0_42] : memref<64x32xf32, #tpu.memory_space<vmem>>, vector<64x32xf32>
    %cst_43 = arith.constant dense<0.000000e+00> : vector<16x32xf32>
    %83 = tpu.matmul %81, %82, %cst_43 {dimension_numbers = #tpu.dot_dimension_numbers<[1], [0], [0], [1], [0, 0, 1, 1], [], []>} : vector<16x64xf32>, vector<64x32xf32>, vector<16x32xf32> -> vector<16x32xf32>
    %c0_44 = arith.constant 0 : index
    %c0_45 = arith.constant 0 : index
    %84 = vector.load %arg15[%c0_44, %c0_45] : memref<1x32xf32, #tpu.memory_space<vmem>>, vector<1x32xf32>
    %85 = vector.broadcast %84 : vector<1x32xf32> to vector<16x32xf32>
    %86 = arith.addf %83, %85 : vector<16x32xf32>
    %87 = arith.addf %86, %74 : vector<16x32xf32>
    %cst_46 = arith.constant dense<0.000000e+00> : vector<32xf32>
    %88 = vector.multi_reduction <add>, %87, %cst_46 [0] : vector<16x32xf32> to vector<32xf32>
    %89 = vector.shape_cast %88 : vector<32xf32> to vector<1x32xf32>
    %cst_47 = arith.constant 6.250000e-02 : f32
    %90 = vector.broadcast %cst_47 : f32 to vector<1x32xf32>
    %91 = arith.mulf %89, %90 : vector<1x32xf32>
    %92 = arith.mulf %87, %87 : vector<16x32xf32>
    %cst_48 = arith.constant dense<0.000000e+00> : vector<32xf32>
    %93 = vector.multi_reduction <add>, %92, %cst_48 [0] : vector<16x32xf32> to vector<32xf32>
    %94 = vector.shape_cast %93 : vector<32xf32> to vector<1x32xf32>
    %cst_49 = arith.constant 6.250000e-02 : f32
    %95 = vector.broadcast %cst_49 : f32 to vector<1x32xf32>
    %96 = arith.mulf %94, %95 : vector<1x32xf32>
    %97 = arith.mulf %91, %91 : vector<1x32xf32>
    %98 = arith.subf %96, %97 : vector<1x32xf32>
    %99 = vector.broadcast %91 : vector<1x32xf32> to vector<16x32xf32>
    %100 = arith.subf %87, %99 : vector<16x32xf32>
    %cst_50 = arith.constant 9.99999974E-6 : f32
    %101 = vector.broadcast %cst_50 : f32 to vector<1x32xf32>
    %102 = arith.addf %98, %101 : vector<1x32xf32>
    %103 = math.rsqrt %102 : vector<1x32xf32>
    %104 = vector.broadcast %103 : vector<1x32xf32> to vector<16x32xf32>
    %105 = arith.mulf %100, %104 : vector<16x32xf32>
    %c0_51 = arith.constant 0 : index
    %c0_52 = arith.constant 0 : index
    %106 = vector.load %arg16[%c0_51, %c0_52] : memref<1x32xf32, #tpu.memory_space<vmem>>, vector<1x32xf32>
    %107 = vector.broadcast %106 : vector<1x32xf32> to vector<16x32xf32>
    %108 = arith.mulf %105, %107 : vector<16x32xf32>
    %c0_53 = arith.constant 0 : index
    %c0_54 = arith.constant 0 : index
    %109 = vector.load %arg17[%c0_53, %c0_54] : memref<1x32xf32, #tpu.memory_space<vmem>>, vector<1x32xf32>
    %110 = vector.broadcast %109 : vector<1x32xf32> to vector<16x32xf32>
    %111 = arith.addf %108, %110 : vector<16x32xf32>
    %c0_55 = arith.constant 0 : index
    %c0_56 = arith.constant 0 : index
    %112 = vector.load %arg18[%c0_55, %c0_56] : memref<16x32xf32, #tpu.memory_space<vmem>>, vector<16x32xf32>
    tpu.vector_store %arg18[%c0_55, %c0_56], %111 {strides = array<i32>} : memref<16x32xf32, #tpu.memory_space<vmem>>, vector<16x32xf32>,
    return
  }
}

</mosaic_0001>

<llo_original>
// kernel: encoder_forward.1
$region0: #{encoder_forward.1}
  #allocation0 [shape = 'u32[]', space=smem, size = 0x4, offset = 0x4, fixed_abs, tag = 'smem constant byte address 0x4 - core index']
  #allocation1 [shape = 'u32[144,128]{1,0:T(1,128)}', space=vmem, size = 0x12000, scoped, tag = 'internal scratch']
  %s0 = inlined_call_operand.hbm [shape: f32[16,32], index: 0, kind: input, shape index: {}]
  %s1 = inlined_call_operand.vmem [shape: f32[64,16], index: 1, kind: input, shape index: {}]
  %s2 = inlined_call_operand.hbm [shape: f32[16,64], index: 2, kind: input, shape index: {}]
  %s3 = inlined_call_operand.hbm [shape: f32[32,96], index: 3, kind: input, shape index: {}]
  %s4 = inlined_call_operand.vmem [shape: f32[1,96], index: 4, kind: input, shape index: {}]
  %s5 = inlined_call_operand.vmem [shape: f32[64,96], index: 5, kind: input, shape index: {}]
  %s6 = inlined_call_operand.vmem [shape: f32[64,64], index: 6, kind: input, shape index: {}]
  %s7 = inlined_call_operand.vmem [shape: f32[8,128], index: 7, kind: input, shape index: {}]
  %s8 = inlined_call_operand.vmem [shape: f32[64,128], index: 8, kind: input, shape index: {}]
  %s9 = inlined_call_operand.hbm [shape: f32[1,32], index: 9, kind: input, shape index: {}]
  %s10 = inlined_call_operand.hbm [shape: f32[1,32], index: 10, kind: input, shape index: {}]
  %s11 = inlined_call_operand.hbm [shape: f32[1,32], index: 11, kind: input, shape index: {}]
  %s12 = inlined_call_operand.hbm [shape: f32[32,64], index: 12, kind: input, shape index: {}]
  %s13 = inlined_call_operand.hbm [shape: f32[1,64], index: 13, kind: input, shape index: {}]
  %s14 = inlined_call_operand.vmem [shape: f32[64,32], index: 14, kind: input, shape index: {}]
  %s15 = inlined_call_operand.hbm [shape: f32[1,32], index: 15, kind: input, shape index: {}]
  %s16 = inlined_call_operand.hbm [shape: f32[1,32], index: 16, kind: input, shape index: {}]
  %s17 = inlined_call_operand.hbm [shape: f32[1,32], index: 17, kind: input, shape index: {}]
  %s18 = inlined_call_operand.hbm [shape: f32[16,32], index: 18, kind: output, shape index: {}]
  %s19 = sld [smem:[#allocation0]]
  $region126: #{encoder_forward.1} parent=0
    _
  %s21 = ssub.s32 1, %s19
  %s22 = scalar_select 0, %s21, %s19
  $region1: #{encoder_forward.1} parent=0
    #allocation2 [shape = 'u8[8192]{0}', space=vmem, size = 0x2000, scoped, tag = 'input window, operand 0, single buffered']
    #allocation3 [shape = 's32[1]{0}', space=sflag, size = 0x4, scoped, tag = 'scoped memory for encoder_forward.1']
    #allocation4 [shape = 's32[1]{0}', space=sflag, size = 0x4, scoped, tag = 'scoped memory for encoder_forward.1']
    #allocation5 [shape = 'u8[8192]{0}', space=vmem, size = 0x2000, scoped, tag = 'input window, operand 2, single buffered']
    #allocation6 [shape = 's32[1]{0}', space=sflag, size = 0x4, scoped, tag = 'scoped memory for encoder_forward.1']
    #allocation7 [shape = 'u8[16384]{0}', space=vmem, size = 0x4000, scoped, tag = 'input window, operand 3, single buffered']
    #allocation8 [shape = 'u8[512]{0}', space=vmem, size = 0x400, scoped, tag = 'input window, operand 9, single buffered']
    #allocation9 [shape = 's32[1]{0}', space=sflag, size = 0x4, scoped, tag = 'scoped memory for encoder_forward.1']
    #allocation10 [shape = 'u8[512]{0}', space=vmem, size = 0x400, scoped, tag = 'input window, operand 10, single buffered']
    #allocation11 [shape = 'u8[512]{0}', space=vmem, size = 0x400, scoped, tag = 'input window, operand 11, single buffered']
    #allocation12 [shape = 's32[1]{0}', space=sflag, size = 0x4, scoped, tag = 'scoped memory for encoder_forward.1']
    #allocation13 [shape = 'u8[16384]{0}', space=vmem, size = 0x4000, scoped, tag = 'input window, operand 12, single buffered']
    #allocation14 [shape = 'u8[512]{0}', space=vmem, size = 0x400, scoped, tag = 'input window, operand 13, single buffered']
    #allocation15 [shape = 's32[1]{0}', space=sflag, size = 0x4, scoped, tag = 'scoped memory for encoder_forward.1']
    #allocation16 [shape = 'u8[512]{0}', space=vmem, size = 0x400, scoped, tag = 'input window, operand 15, single buffered']
    #allocation17 [shape = 'u8[512]{0}', space=vmem, size = 0x400, scoped, tag = 'input window, operand 16, single buffered']
    #allocation18 [shape = 's32[1]{0}', space=sflag, size = 0x4, scoped, tag = 'scoped memory for encoder_forward.1']
    #allocation19 [shape = 'u8[512]{0}', space=vmem, size = 0x400, scoped, tag = 'input window, operand 17, single buffered']
    #allocation20 [shape = 'u8[8192]{0}', space=vmem, size = 0x2000, scoped, tag = 'output window, operand 0, single buffered']
    %23 = vsyncpa [#allocation3], 0
    %24 = vsyncpa [#allocation6], 0
    %25 = vsyncpa [#allocation9], 0
    %26 = vsyncpa [#allocation12], 0
    %27 = vsyncpa [#allocation15], 0
    %28 = vsyncpa [#allocation18], 0
    %29 = vsyncpa [#allocation4], 0
    // Predicated region
    $region2: #{encoder_forward.1} parent=1 // pred_check
      _
    $region3: #{encoder_forward.1} parent=1 // pred_check_branch
      %31 = sbr.rel (0) target = $region5
    $region4: #{encoder_forward.1} parent=1 // pred_region
      %s33 = ssub.s32 256, 256
      %34 = vsyncadd [#allocation3], %s33
      %s35 = sshll.u32 [#allocation2], 4
      %s36 = int_to_ptr.vmem [resolvable:$true] %s35
      %41 = dma.hbm_to_vmem [thread:$0]  %s0, 256, %s36, [#allocation3], 128, 128, 8
    $region5: #{encoder_forward.1} parent=1 // pred_fallthru
      _
    // Predicated region
    $region6: #{encoder_forward.1} parent=1 // pred_check
      _
    $region7: #{encoder_forward.1} parent=1 // pred_check_branch
      %43 = sbr.rel (0) target = $region9
    $region8: #{encoder_forward.1} parent=1 // pred_region
      _
    $region9: #{encoder_forward.1} parent=1 // pred_fallthru
      _
    // Predicated region
    $region10: #{encoder_forward.1} parent=1 // pred_check
      _
    $region11: #{encoder_forward.1} parent=1 // pred_check_branch
      %45 = sbr.rel (0) target = $region13
    $region12: #{encoder_forward.1} parent=1 // pred_region
      %s47 = ssub.s32 256, 256
      %48 = vsyncadd [#allocation6], %s47
      %s49 = sshll.u32 [#allocation5], 4
      %s50 = int_to_ptr.vmem [resolvable:$true] %s49
      %55 = dma.hbm_to_vmem [thread:$0]  %s2, 256, %s50, [#allocation6], 128, 128, 8
    $region13: #{encoder_forward.1} parent=1 // pred_fallthru
      _
    // Predicated region
    $region14: #{encoder_forward.1} parent=1 // pred_check
      _
    $region15: #{encoder_forward.1} parent=1 // pred_check_branch
      %57 = sbr.rel (0) target = $region17
    $region16: #{encoder_forward.1} parent=1 // pred_region
      %s59 = ssub.s32 512, 512
      %60 = vsyncadd [#allocation6], %s59
      %s61 = sshll.u32 [#allocation7], 4
      %s62 = int_to_ptr.vmem [resolvable:$true] %s61
      %67 = dma.hbm_to_vmem [thread:$0]  %s3, 512, %s62, [#allocation6], 128, 128, 8
    $region17: #{encoder_forward.1} parent=1 // pred_fallthru
      _
    // Predicated region
    $region18: #{encoder_forward.1} parent=1 // pred_check
      _
    $region19: #{encoder_forward.1} parent=1 // pred_check_branch
      %69 = sbr.rel (0) target = $region21
    $region20: #{encoder_forward.1} parent=1 // pred_region
      _
    $region21: #{encoder_forward.1} parent=1 // pred_fallthru
      _
    // Predicated region
    $region22: #{encoder_forward.1} parent=1 // pred_check
      _
    $region23: #{encoder_forward.1} parent=1 // pred_check_branch
      %71 = sbr.rel (0) target = $region25
    $region24: #{encoder_forward.1} parent=1 // pred_region
      _
    $region25: #{encoder_forward.1} parent=1 // pred_fallthru
      _
    // Predicated region
    $region26: #{encoder_forward.1} parent=1 // pred_check
      _
    $region27: #{encoder_forward.1} parent=1 // pred_check_branch
      %73 = sbr.rel (0) target = $region29
    $region28: #{encoder_forward.1} parent=1 // pred_region
      _
    $region29: #{encoder_forward.1} parent=1 // pred_fallthru
      _
    // Predicated region
    $region30: #{encoder_forward.1} parent=1 // pred_check
      _
    $region31: #{encoder_forward.1} parent=1 // pred_check_branch
      %75 = sbr.rel (0) target = $region33
    $region32: #{encoder_forward.1} parent=1 // pred_region
      _
    $region33: #{encoder_forward.1} parent=1 // pred_fallthru
      _
    // Predicated region
    $region34: #{encoder_forward.1} parent=1 // pred_check
      _
    $region35: #{encoder_forward.1} parent=1 // pred_check_branch
      %77 = sbr.rel (0) target = $region37
    $region36: #{encoder_forward.1} parent=1 // pred_region
      _
    $region37: #{encoder_forward.1} parent=1 // pred_fallthru
      _
    // Predicated region
    $region38: #{encoder_forward.1} parent=1 // pred_check
      _
    $region39: #{encoder_forward.1} parent=1 // pred_check_branch
      %79 = sbr.rel (0) target = $region41
    $region40: #{encoder_forward.1} parent=1 // pred_region
      %s81 = ssub.s32 16, 16
      %82 = vsyncadd [#allocation9], %s81
      %s84 = sshll.u32 [#allocation8], 4
      %s85 = int_to_ptr.vmem [resolvable:$true] %s84
      %87 = dma.hbm_to_vmem [thread:$0]  %s9, 16, %s85, [#allocation9]
    $region41: #{encoder_forward.1} parent=1 // pred_fallthru
      _
    // Predicated region
    $region42: #{encoder_forward.1} parent=1 // pred_check
      _
    $region43: #{encoder_forward.1} parent=1 // pred_check_branch
      %89 = sbr.rel (0) target = $region45
    $region44: #{encoder_forward.1} parent=1 // pred_region
      %s91 = ssub.s32 16, 16
      %92 = vsyncadd [#allocation9], %s91
      %s94 = sshll.u32 [#allocation10], 4
      %s95 = int_to_ptr.vmem [resolvable:$true] %s94
      %97 = dma.hbm_to_vmem [thread:$0]  %s10, 16, %s95, [#allocation9]
    $region45: #{encoder_forward.1} parent=1 // pred_fallthru
      _
    // Predicated region
    $region46: #{encoder_forward.1} parent=1 // pred_check
      _
    $region47: #{encoder_forward.1} parent=1 // pred_check_branch
      %99 = sbr.rel (0) target = $region49
    $region48: #{encoder_forward.1} parent=1 // pred_region
      %s101 = ssub.s32 16, 16
      %102 = vsyncadd [#allocation12], %s101
      %s104 = sshll.u32 [#allocation11], 4
      %s105 = int_to_ptr.vmem [resolvable:$true] %s104
      %107 = dma.hbm_to_vmem [thread:$0]  %s11, 16, %s105, [#allocation12]
    $region49: #{encoder_forward.1} parent=1 // pred_fallthru
      _
    // Predicated region
    $region50: #{encoder_forward.1} parent=1 // pred_check
      _
    $region51: #{encoder_forward.1} parent=1 // pred_check_branch
      %109 = sbr.rel (0) target = $region53
    $region52: #{encoder_forward.1} parent=1 // pred_region
      %s111 = ssub.s32 512, 512
      %112 = vsyncadd [#allocation12], %s111
      %s113 = sshll.u32 [#allocation13], 4
      %s114 = int_to_ptr.vmem [resolvable:$true] %s113
      %119 = dma.hbm_to_vmem [thread:$0]  %s12, 512, %s114, [#allocation12], 128, 128, 8
    $region53: #{encoder_forward.1} parent=1 // pred_fallthru
      _
    // Predicated region
    $region54: #{encoder_forward.1} parent=1 // pred_check
      _
    $region55: #{encoder_forward.1} parent=1 // pred_check_branch
      %121 = sbr.rel (0) target = $region57
    $region56: #{encoder_forward.1} parent=1 // pred_region
      %s123 = ssub.s32 16, 16
      %124 = vsyncadd [#allocation15], %s123
      %s126 = sshll.u32 [#allocation14], 4
      %s127 = int_to_ptr.vmem [resolvable:$true] %s126
      %129 = dma.hbm_to_vmem [thread:$0]  %s13, 16, %s127, [#allocation15]
    $region57: #{encoder_forward.1} parent=1 // pred_fallthru
      _
    // Predicated region
    $region58: #{encoder_forward.1} parent=1 // pred_check
      _
    $region59: #{encoder_forward.1} parent=1 // pred_check_branch
      %131 = sbr.rel (0) target = $region61
    $region60: #{encoder_forward.1} parent=1 // pred_region
      _
    $region61: #{encoder_forward.1} parent=1 // pred_fallthru
      _
    // Predicated region
    $region62: #{encoder_forward.1} parent=1 // pred_check
      _
    $region63: #{encoder_forward.1} parent=1 // pred_check_branch
      %133 = sbr.rel (0) target = $region65
    $region64: #{encoder_forward.1} parent=1 // pred_region
      %s135 = ssub.s32 16, 16
      %136 = vsyncadd [#allocation15], %s135
      %s138 = sshll.u32 [#allocation16], 4
      %s139 = int_to_ptr.vmem [resolvable:$true] %s138
      %141 = dma.hbm_to_vmem [thread:$0]  %s15, 16, %s139, [#allocation15]
    $region65: #{encoder_forward.1} parent=1 // pred_fallthru
      _
    // Predicated region
    $region66: #{encoder_forward.1} parent=1 // pred_check
      _
    $region67: #{encoder_forward.1} parent=1 // pred_check_branch
      %143 = sbr.rel (0) target = $region69
    $region68: #{encoder_forward.1} parent=1 // pred_region
      %s145 = ssub.s32 16, 16
      %146 = vsyncadd [#allocation18], %s145
      %s148 = sshll.u32 [#allocation17], 4
      %s149 = int_to_ptr.vmem [resolvable:$true] %s148
      %151 = dma.hbm_to_vmem [thread:$0]  %s16, 16, %s149, [#allocation18]
    $region69: #{encoder_forward.1} parent=1 // pred_fallthru
      _
    // Predicated region
    $region70: #{encoder_forward.1} parent=1 // pred_check
      _
    $region71: #{encoder_forward.1} parent=1 // pred_check_branch
      %153 = sbr.rel (0) target = $region73
    $region72: #{encoder_forward.1} parent=1 // pred_region
      %s155 = ssub.s32 16, 16
      %156 = vsyncadd [#allocation18], %s155
      %s158 = sshll.u32 [#allocation19], 4
      %s159 = int_to_ptr.vmem [resolvable:$true] %s158
      %161 = dma.hbm_to_vmem [thread:$0]  %s17, 16, %s159, [#allocation18]
    $region73: #{encoder_forward.1} parent=1 // pred_fallthru
      _
    // Predicated region
    $region74: #{encoder_forward.1} parent=1 // pred_check
      _
    $region75: #{encoder_forward.1} parent=1 // pred_check_branch
      %163 = sbr.rel (0) target = $region77
    $region76: #{encoder_forward.1} parent=1 // pred_region
      %164 = dma.done [#allocation3], 256
    $region77: #{encoder_forward.1} parent=1 // pred_fallthru
      _
    // Predicated region
    $region78: #{encoder_forward.1} parent=1 // pred_check
      _
    $region79: #{encoder_forward.1} parent=1 // pred_check_branch
      %166 = sbr.rel (0) target = $region81
    $region80: #{encoder_forward.1} parent=1 // pred_region
      %167 = dma.done [#allocation6], 256
    $region81: #{encoder_forward.1} parent=1 // pred_fallthru
      _
    // Predicated region
    $region82: #{encoder_forward.1} parent=1 // pred_check
      _
    $region83: #{encoder_forward.1} parent=1 // pred_check_branch
      %169 = sbr.rel (0) target = $region85
    $region84: #{encoder_forward.1} parent=1 // pred_region
      %170 = dma.done [#allocation6], 512
    $region85: #{encoder_forward.1} parent=1 // pred_fallthru
      _
    // Predicated region
    $region86: #{encoder_forward.1} parent=1 // pred_check
      _
    $region87: #{encoder_forward.1} parent=1 // pred_check_branch
      %172 = sbr.rel (0) target = $region89
    $region88: #{encoder_forward.1} parent=1 // pred_region
      %173 = dma.done [#allocation9], 16
    $region89: #{encoder_forward.1} parent=1 // pred_fallthru
      _
    // Predicated region
    $region90: #{encoder_forward.1} parent=1 // pred_check
      _
    $region91: #{encoder_forward.1} parent=1 // pred_check_branch
      %175 = sbr.rel (0) target = $region93
    $region92: #{encoder_forward.1} parent=1 // pred_region
      %176 = dma.done [#allocation9], 16
    $region93: #{encoder_forward.1} parent=1 // pred_fallthru
      _
    // Predicated region
    $region94: #{encoder_forward.1} parent=1 // pred_check
      _
    $region95: #{encoder_forward.1} parent=1 // pred_check_branch
      %178 = sbr.rel (0) target = $region97
    $region96: #{encoder_forward.1} parent=1 // pred_region
      %179 = dma.done [#allocation12], 16
    $region97: #{encoder_forward.1} parent=1 // pred_fallthru
      _
    // Predicated region
    $region98: #{encoder_forward.1} parent=1 // pred_check
      _
    $region99: #{encoder_forward.1} parent=1 // pred_check_branch
      %181 = sbr.rel (0) target = $region101
    $region100: #{encoder_forward.1} parent=1 // pred_region
      %182 = dma.done [#allocation12], 512
    $region101: #{encoder_forward.1} parent=1 // pred_fallthru
      _
    // Predicated region
    $region102: #{encoder_forward.1} parent=1 // pred_check
      _
    $region103: #{encoder_forward.1} parent=1 // pred_check_branch
      %184 = sbr.rel (0) target = $region105
    $region104: #{encoder_forward.1} parent=1 // pred_region
      %185 = dma.done [#allocation15], 16
    $region105: #{encoder_forward.1} parent=1 // pred_fallthru
      _
    // Predicated region
    $region106: #{encoder_forward.1} parent=1 // pred_check
      _
    $region107: #{encoder_forward.1} parent=1 // pred_check_branch
      %187 = sbr.rel (0) target = $region109
    $region108: #{encoder_forward.1} parent=1 // pred_region
      %188 = dma.done [#allocation15], 16
    $region109: #{encoder_forward.1} parent=1 // pred_fallthru
      _
    // Predicated region
    $region110: #{encoder_forward.1} parent=1 // pred_check
      _
    $region111: #{encoder_forward.1} parent=1 // pred_check_branch
      %190 = sbr.rel (0) target = $region113
    $region112: #{encoder_forward.1} parent=1 // pred_region
      %191 = dma.done [#allocation18], 16
    $region113: #{encoder_forward.1} parent=1 // pred_fallthru
      _
    // Predicated region
    $region114: #{encoder_forward.1} parent=1 // pred_check
      _
    $region115: #{encoder_forward.1} parent=1 // pred_check_branch
      %193 = sbr.rel (0) target = $region117
    $region116: #{encoder_forward.1} parent=1 // pred_region
      %194 = dma.done [#allocation18], 16
    $region117: #{encoder_forward.1} parent=1 // pred_fallthru
      _
    %v195 = vld [vmem:[#allocation2] sm:$0xff]
    %v196 = vld [vmem:[#allocation2 + $0x8] sm:$0xff]
    %v197 = vld [vmem:[#allocation7] sm:$0xff]
    %v198 = vld [vmem:[#allocation7 + $0x8] sm:$0xff]
    %v199 = vld [vmem:[#allocation7 + $0x10] sm:$0xff]
    %v200 = vld [vmem:[#allocation7 + $0x18] sm:$0xff]
    %vm201 = vcmask 261120
    %v203 = vsel %vm201, %v195, 0
    %v206 = vsel %vm201, %v196, 0
    %208 = vmatprep.subr.mxu0 0.0
    %209 = vmatpush1.msra.mxu0 0.0
    %210 = vmatprep.subr.mxu0 0.0
    %211 = vmatpush1.msra.mxu0 0.0
    %212 = vmatprep.subr.mxu0 0.0
    %213 = vmatpush1.msra.mxu0 0.0
    %214 = vmatprep.subr.mxu0 0.0
    %215 = vmatpush1.msra.mxu0 0.0
    %216 = vmatprep.subr.mxu0 0.0
    %217 = vmatpush1.msra.mxu0 0.0
    %218 = vmatprep.subr.mxu0 0.0
    %219 = vmatpush1.msra.mxu0 0.0
    %220 = vmatprep.subr.mxu0 0.0
    %221 = vmatpush1.msra.mxu0 0.0
    %222 = vmatprep.subr.mxu0 0.0
    %223 = vmatpush1.msra.mxu0 0.0
    %224 = vmatprep.subr.mxu0 0.0
    %225 = vmatpush1.msra.mxu0 0.0
    %226 = vmatprep.subr.mxu0 0.0
    %227 = vmatpush1.msra.mxu0 0.0
    %228 = vmatprep.subr.mxu0 0.0
    %229 = vmatpush1.msra.mxu0 0.0
    %230 = vmatprep.subr.mxu0 0.0
    %231 = vmatpush1.msra.mxu0 0.0
    %232 = vmatprep.subr.mxu0 0.0
    %233 = vmatpush1.msra.mxu0 %v200
    %234 = vmatprep.subr.mxu0 0.0
    %235 = vmatpush1.msra.mxu0 %v199
    %236 = vmatprep.subr.mxu0 0.0
    %237 = vmatpush1.msra.mxu0 %v198
    %238 = vmatprep.subr.mxu0 0.0
    %239 = vmatpush1.msra.mxu0 %v197
    %240 = vmatprep.subr.mxu0 0.0
    %241 = vmatpush2.msra.mxu0 0.0
    %242 = vmatprep.subr.mxu0 0.0
    %243 = vmatpush2.msra.mxu0 0.0
    %244 = vmatprep.subr.mxu0 0.0
    %245 = vmatpush2.msra.mxu0 0.0
    %246 = vmatprep.subr.mxu0 0.0
    %247 = vmatpush2.msra.mxu0 0.0
    %248 = vmatprep.subr.mxu0 0.0
    %249 = vmatpush2.msra.mxu0 0.0
    %250 = vmatprep.subr.mxu0 0.0
    %251 = vmatpush2.msra.mxu0 0.0
    %252 = vmatprep.subr.mxu0 0.0
    %253 = vmatpush2.msra.mxu0 0.0
    %254 = vmatprep.subr.mxu0 0.0
    %255 = vmatpush2.msra.mxu0 0.0
    %256 = vmatprep.subr.mxu0 0.0
    %257 = vmatpush2.msra.mxu0 0.0
    %258 = vmatprep.subr.mxu0 0.0
    %259 = vmatpush2.msra.mxu0 0.0
    %260 = vmatprep.subr.mxu0 0.0
    %261 = vmatpush2.msra.mxu0 0.0
    %262 = vmatprep.subr.mxu0 0.0
    %263 = vmatpush2.msra.mxu0 0.0
    %264 = vmatprep.subr.mxu0 0.0
    %265 = vmatpush2.msra.mxu0 0.0
    %266 = vmatprep.subr.mxu0 0.0
    %267 = vmatpush2.msra.mxu0 0.0
    %268 = vmatprep.subr.mxu0 0.0
    %269 = vmatpush2.msra.mxu0 0.0
    %270 = vmatprep.subr.mxu0 0.0
    %271 = vmatpush2.msra.mxu0 0.0
    %272 = vmatprep.mubr.f32.mxu0 0.0
    %273 = vmatmul.mubr.f32.gmra.mxu0 %v203
    %v274 = vpop.f32.mrf.mxu0
    %v275 = vadd.f32 0.0, %v274
    %v276 = vpop.f32.mrf.mxu0
    %277 = vmatprep.mubr.f32.mxu0 0.0
    %278 = vmatmul.mubr.f32.gmra.mxu0 %v206
    %v279 = vpop.f32.mrf.mxu0
    %v280 = vadd.f32 0.0, %v279
    %v281 = vpop.f32.mrf.mxu0
    %282 = vdwg.mxu0
    %v283 = vld [vmem:[%s1] sm:$0xff]
    %v284 = vld [vmem:[%s1 + $0x8] sm:$0xff]
    %v285 = vld [vmem:[%s1 + $0x10] sm:$0xff]
    %v286 = vld [vmem:[%s1 + $0x18] sm:$0xff]
    %v287 = vld [vmem:[%s1 + $0x20] sm:$0xff]
    %v288 = vld [vmem:[%s1 + $0x28] sm:$0xff]
    %v289 = vld [vmem:[%s1 + $0x30] sm:$0xff]
    %v290 = vld [vmem:[%s1 + $0x38] sm:$0xff]
    %v291 = vld [vmem:[%s4] sm:$0x1]
    %v293 = vlaneseq
    %v294 = vshrl.u32 %v293, 7
    %v295 = vsub.s32 0, %v294
    %v296 = vrot.slane %v291, %v295
    %vm298 = vcmask 130048
    %v300 = vsel %vm298, %v283, 0
    %v303 = vsel %vm298, %v284, 0
    %v306 = vsel %vm298, %v285, 0
    %v309 = vsel %vm298, %v286, 0
    %v312 = vsel %vm298, %v287, 0
    %v315 = vsel %vm298, %v288, 0
    %v318 = vsel %vm298, %v289, 0
    %v321 = vsel %vm298, %v290, 0
    %323 = vmatprep.subr.mxu0 0.0
    %324 = vmatpush1.msra.mxu0 0.0
    %325 = vmatprep.subr.mxu0 0.0
    %326 = vmatpush1.msra.mxu0 0.0
    %327 = vmatprep.subr.mxu0 0.0
    %328 = vmatpush1.msra.mxu0 0.0
    %329 = vmatprep.subr.mxu0 0.0
    %330 = vmatpush1.msra.mxu0 0.0
    %331 = vmatprep.subr.mxu0 0.0
    %332 = vmatpush1.msra.mxu0 0.0
    %333 = vmatprep.subr.mxu0 0.0
    %334 = vmatpush1.msra.mxu0 0.0
    %335 = vmatprep.subr.mxu0 0.0
    %336 = vmatpush1.msra.mxu0 0.0
    %337 = vmatprep.subr.mxu0 0.0
    %338 = vmatpush1.msra.mxu0 0.0
    %339 = vmatprep.subr.mxu0 0.0
    %340 = vmatpush1.msra.mxu0 0.0
    %341 = vmatprep.subr.mxu0 0.0
    %342 = vmatpush1.msra.mxu0 0.0
    %343 = vmatprep.subr.mxu0 0.0
    %344 = vmatpush1.msra.mxu0 0.0
    %345 = vmatprep.subr.mxu0 0.0
    %346 = vmatpush1.msra.mxu0 0.0
    %347 = vmatprep.subr.mxu0 0.0
    %348 = vmatpush1.msra.mxu0 0.0
    %349 = vmatprep.subr.mxu0 0.0
    %350 = vmatpush1.msra.mxu0 0.0
    %351 = vmatprep.subr.mxu0 0.0
    %352 = vmatpush1.msra.mxu0 %v280
    %353 = vmatprep.subr.mxu0 0.0
    %354 = vmatpush1.msra.mxu0 %v275
    %355 = vmatprep.subr.mxu0 0.0
    %356 = vmatpush2.msra.mxu0 0.0
    %357 = vmatprep.subr.mxu0 0.0
    %358 = vmatpush2.msra.mxu0 0.0
    %359 = vmatprep.subr.mxu0 0.0
    %360 = vmatpush2.msra.mxu0 0.0
    %361 = vmatprep.subr.mxu0 0.0
    %362 = vmatpush2.msra.mxu0 0.0
    %363 = vmatprep.subr.mxu0 0.0
    %364 = vmatpush2.msra.mxu0 0.0
    %365 = vmatprep.subr.mxu0 0.0
    %366 = vmatpush2.msra.mxu0 0.0
    %367 = vmatprep.subr.mxu0 0.0
    %368 = vmatpush2.msra.mxu0 0.0
    %369 = vmatprep.subr.mxu0 0.0
    %370 = vmatpush2.msra.mxu0 0.0
    %371 = vmatprep.subr.mxu0 0.0
    %372 = vmatpush2.msra.mxu0 0.0
    %373 = vmatprep.subr.mxu0 0.0
    %374 = vmatpush2.msra.mxu0 0.0
    %375 = vmatprep.subr.mxu0 0.0
    %376 = vmatpush2.msra.mxu0 0.0
    %377 = vmatprep.subr.mxu0 0.0
    %378 = vmatpush2.msra.mxu0 0.0
    %379 = vmatprep.subr.mxu0 0.0
    %380 = vmatpush2.msra.mxu0 0.0
    %381 = vmatprep.subr.mxu0 0.0
    %382 = vmatpush2.msra.mxu0 0.0
    %383 = vmatprep.subr.mxu0 0.0
    %384 = vmatpush2.msra.mxu0 0.0
    %385 = vmatprep.subr.mxu0 0.0
    %386 = vmatpush2.msra.mxu0 0.0
    %387 = vmatprep.mubr.f32.mxu0 0.0
    %388 = vmatmul.mubr.f32.gmra.mxu0 %v300
    %v389 = vpop.f32.mrf.mxu0
    %v390 = vadd.f32 %v296, %v389
    %v391 = vpop.f32.mrf.mxu0
    %392 = vmatprep.mubr.f32.mxu0 0.0
    %393 = vmatmul.mubr.f32.gmra.mxu0 %v303
    %v394 = vpop.f32.mrf.mxu0
    %v395 = vadd.f32 %v296, %v394
    %v396 = vpop.f32.mrf.mxu0
    %397 = vmatprep.mubr.f32.mxu0 0.0
    %398 = vmatmul.mubr.f32.gmra.mxu0 %v306
    %v399 = vpop.f32.mrf.mxu0
    %v400 = vadd.f32 %v296, %v399
    %v401 = vpop.f32.mrf.mxu0
    %402 = vmatprep.mubr.f32.mxu0 0.0
    %403 = vmatmul.mubr.f32.gmra.mxu0 %v309
    %v404 = vpop.f32.mrf.mxu0
    %v405 = vadd.f32 %v296, %v404
    %v406 = vpop.f32.mrf.mxu0
    %407 = vmatprep.mubr.f32.mxu0 0.0
    %408 = vmatmul.mubr.f32.gmra.mxu0 %v312
    %v409 = vpop.f32.mrf.mxu0
    %v410 = vadd.f32 %v296, %v409
    %v411 = vpop.f32.mrf.mxu0
    %412 = vmatprep.mubr.f32.mxu0 0.0
    %413 = vmatmul.mubr.f32.gmra.mxu0 %v315
    %v414 = vpop.f32.mrf.mxu0
    %v415 = vadd.f32 %v296, %v414
    %v416 = vpop.f32.mrf.mxu0
    %417 = vmatprep.mubr.f32.mxu0 0.0
    %418 = vmatmul.mubr.f32.gmra.mxu0 %v318
    %v419 = vpop.f32.mrf.mxu0
    %v420 = vadd.f32 %v296, %v419
    %v421 = vpop.f32.mrf.mxu0
    %422 = vmatprep.mubr.f32.mxu0 0.0
    %423 = vmatmul.mubr.f32.gmra.mxu0 %v321
    %v424 = vpop.f32.mrf.mxu0
    %v425 = vadd.f32 %v296, %v424
    %v426 = vpop.f32.mrf.mxu0
    %427 = vdwg.mxu0
    %v428 = vld [vmem:[%s5] sm:$0xff]
    %v429 = vld [vmem:[%s5 + $0x8] sm:$0xff]
    %v430 = vld [vmem:[%s5 + $0x10] sm:$0xff]
    %v431 = vld [vmem:[%s5 + $0x18] sm:$0xff]
    %v432 = vld [vmem:[%s5 + $0x20] sm:$0xff]
    %v433 = vld [vmem:[%s5 + $0x28] sm:$0xff]
    %v434 = vld [vmem:[%s5 + $0x30] sm:$0xff]
    %v435 = vld [vmem:[%s5 + $0x38] sm:$0xff]
    %v436 = vmul.f32 %v390, %v428
    %v437 = vmul.f32 %v395, %v429
    %v438 = vmul.f32 %v400, %v430
    %v439 = vmul.f32 %v405, %v431
    %v440 = vmul.f32 %v410, %v432
    %v441 = vmul.f32 %v415, %v433
    %v442 = vmul.f32 %v420, %v434
    %v443 = vmul.f32 %v425, %v435
    %452 = vrot.lane.b32.xlu0 %v436, 104
    %v453 = vpop.permute.xlu0 %452
    %454 = vrot.lane.b32.xlu0 %v437, 104
    %v455 = vpop.permute.xlu0 %454
    %456 = vrot.lane.b32.xlu0 %v438, 104
    %v457 = vpop.permute.xlu0 %456
    %458 = vrot.lane.b32.xlu0 %v439, 104
    %v459 = vpop.permute.xlu0 %458
    %460 = vrot.lane.b32.xlu0 %v440, 104
    %v461 = vpop.permute.xlu0 %460
    %462 = vrot.lane.b32.xlu0 %v441, 104
    %v463 = vpop.permute.xlu0 %462
    %464 = vrot.lane.b32.xlu0 %v442, 104
    %v465 = vpop.permute.xlu0 %464
    %466 = vrot.lane.b32.xlu0 %v443, 104
    %v467 = vpop.permute.xlu0 %466
    %v476 = vadd.f32 %v436, %v453
    %v477 = vadd.f32 %v437, %v455
    %v478 = vadd.f32 %v438, %v457
    %v479 = vadd.f32 %v439, %v459
    %v480 = vadd.f32 %v440, %v461
    %v481 = vadd.f32 %v441, %v463
    %v482 = vadd.f32 %v442, %v465
    %v483 = vadd.f32 %v443, %v467
    %484 = vrot.lane.b32.xlu0 %v436, 80
    %v485 = vpop.permute.xlu0 %484
    %486 = vrot.lane.b32.xlu0 %v437, 80
    %v487 = vpop.permute.xlu0 %486
    %488 = vrot.lane.b32.xlu0 %v438, 80
    %v489 = vpop.permute.xlu0 %488
    %490 = vrot.lane.b32.xlu0 %v439, 80
    %v491 = vpop.permute.xlu0 %490
    %492 = vrot.lane.b32.xlu0 %v440, 80
    %v493 = vpop.permute.xlu0 %492
    %494 = vrot.lane.b32.xlu0 %v441, 80
    %v495 = vpop.permute.xlu0 %494
    %496 = vrot.lane.b32.xlu0 %v442, 80
    %v497 = vpop.permute.xlu0 %496
    %498 = vrot.lane.b32.xlu0 %v443, 80
    %v499 = vpop.permute.xlu0 %498
    %v508 = vadd.f32 %v476, %v485
    %v509 = vadd.f32 %v477, %v487
    %v510 = vadd.f32 %v478, %v489
    %v511 = vadd.f32 %v479, %v491
    %v512 = vadd.f32 %v480, %v493
    %v513 = vadd.f32 %v481, %v495
    %v514 = vadd.f32 %v482, %v497
    %v515 = vadd.f32 %v483, %v499
    %516 = vrot.lane.b32.xlu0 %v436, 56
    %v517 = vpop.permute.xlu0 %516
    %518 = vrot.lane.b32.xlu0 %v437, 56
    %v519 = vpop.permute.xlu0 %518
    %520 = vrot.lane.b32.xlu0 %v438, 56
    %v521 = vpop.permute.xlu0 %520
    %522 = vrot.lane.b32.xlu0 %v439, 56
    %v523 = vpop.permute.xlu0 %522
    %524 = vrot.lane.b32.xlu0 %v440, 56
    %v525 = vpop.permute.xlu0 %524
    %526 = vrot.lane.b32.xlu0 %v441, 56
    %v527 = vpop.permute.xlu0 %526
    %528 = vrot.lane.b32.xlu0 %v442, 56
    %v529 = vpop.permute.xlu0 %528
    %530 = vrot.lane.b32.xlu0 %v443, 56
    %v531 = vpop.permute.xlu0 %530
    %v540 = vadd.f32 %v508, %v517
    %v541 = vadd.f32 %v509, %v519
    %v542 = vadd.f32 %v510, %v521
    %v543 = vadd.f32 %v511, %v523
    %v544 = vadd.f32 %v512, %v525
    %v545 = vadd.f32 %v513, %v527
    %v546 = vadd.f32 %v514, %v529
    %v547 = vadd.f32 %v515, %v531
    %v548 = vld [vmem:[%s6] sm:$0xff]
    %v549 = vld [vmem:[%s6 + $0x8] sm:$0xff]
    %v550 = vld [vmem:[%s6 + $0x10] sm:$0xff]
    %v551 = vld [vmem:[%s6 + $0x18] sm:$0xff]
    %v552 = vld [vmem:[%s6 + $0x20] sm:$0xff]
    %v553 = vld [vmem:[%s6 + $0x28] sm:$0xff]
    %v554 = vld [vmem:[%s6 + $0x30] sm:$0xff]
    %v555 = vld [vmem:[%s6 + $0x38] sm:$0xff]
    %564 = vrot.lane.b32.xlu0 %v540, 120
    %v565 = vpop.permute.xlu0 %564
    %566 = vrot.lane.b32.xlu0 %v541, 120
    %v567 = vpop.permute.xlu0 %566
    %568 = vrot.lane.b32.xlu0 %v542, 120
    %v569 = vpop.permute.xlu0 %568
    %570 = vrot.lane.b32.xlu0 %v543, 120
    %v571 = vpop.permute.xlu0 %570
    %572 = vrot.lane.b32.xlu0 %v544, 120
    %v573 = vpop.permute.xlu0 %572
    %574 = vrot.lane.b32.xlu0 %v545, 120
    %v575 = vpop.permute.xlu0 %574
    %576 = vrot.lane.b32.xlu0 %v546, 120
    %v577 = vpop.permute.xlu0 %576
    %578 = vrot.lane.b32.xlu0 %v547, 120
    %v579 = vpop.permute.xlu0 %578
    %vm580 = vcmask 64512
    %v581 = vsel %vm580, %v540, 0
    %v583 = vsel %vm580, %v541, 0
    %v585 = vsel %vm580, %v542, 0
    %v587 = vsel %vm580, %v543, 0
    %v589 = vsel %vm580, %v544, 0
    %v591 = vsel %vm580, %v545, 0
    %v593 = vsel %vm580, %v546, 0
    %v595 = vsel %vm580, %v547, 0
    %v597 = vsel %vm580, %v565, 0
    %v599 = vsel %vm580, %v567, 0
    %v601 = vsel %vm580, %v569, 0
    %v603 = vsel %vm580, %v571, 0
    %v605 = vsel %vm580, %v573, 0
    %v607 = vsel %vm580, %v575, 0
    %v609 = vsel %vm580, %v577, 0
    %v611 = vsel %vm580, %v579, 0
    %613 = vmatprep.subr.mxu0 0.0
    %614 = vmatpush1.xpose.msra.mxu0 0.0
    %615 = vmatprep.subr.mxu0 0.0
    %616 = vmatpush1.xpose.msra.mxu0 0.0
    %617 = vmatprep.subr.mxu0 0.0
    %618 = vmatpush1.xpose.msra.mxu0 0.0
    %619 = vmatprep.subr.mxu0 0.0
    %620 = vmatpush1.xpose.msra.mxu0 0.0
    %621 = vmatprep.subr.mxu0 0.0
    %622 = vmatpush1.xpose.msra.mxu0 0.0
    %623 = vmatprep.subr.mxu0 0.0
    %624 = vmatpush1.xpose.msra.mxu0 0.0
    %625 = vmatprep.subr.mxu0 0.0
    %626 = vmatpush1.xpose.msra.mxu0 0.0
    %627 = vmatprep.subr.mxu0 0.0
    %628 = vmatpush1.xpose.msra.mxu0 0.0
    %629 = vmatprep.subr.mxu0 0.0
    %630 = vmatpush1.xpose.msra.mxu0 %v611
    %631 = vmatprep.subr.mxu0 0.0
    %632 = vmatpush1.xpose.msra.mxu0 %v609
    %633 = vmatprep.subr.mxu0 0.0
    %634 = vmatpush1.xpose.msra.mxu0 %v607
    %635 = vmatprep.subr.mxu0 0.0
    %636 = vmatpush1.xpose.msra.mxu0 %v605
    %637 = vmatprep.subr.mxu0 0.0
    %638 = vmatpush1.xpose.msra.mxu0 %v603
    %639 = vmatprep.subr.mxu0 0.0
    %640 = vmatpush1.xpose.msra.mxu0 %v601
    %641 = vmatprep.subr.mxu0 0.0
    %642 = vmatpush1.xpose.msra.mxu0 %v599
    %643 = vmatprep.subr.mxu0 0.0
    %644 = vmatpush1.xpose.msra.mxu0 %v597
    %645 = vmatprep.subr.mxu0 0.0
    %646 = vmatpush2.xpose.msra.mxu0 0.0
    %647 = vmatprep.subr.mxu0 0.0
    %648 = vmatpush2.xpose.msra.mxu0 0.0
    %649 = vmatprep.subr.mxu0 0.0
    %650 = vmatpush2.xpose.msra.mxu0 0.0
    %651 = vmatprep.subr.mxu0 0.0
    %652 = vmatpush2.xpose.msra.mxu0 0.0
    %653 = vmatprep.subr.mxu0 0.0
    %654 = vmatpush2.xpose.msra.mxu0 0.0
    %655 = vmatprep.subr.mxu0 0.0
    %656 = vmatpush2.xpose.msra.mxu0 0.0
    %657 = vmatprep.subr.mxu0 0.0
    %658 = vmatpush2.xpose.msra.mxu0 0.0
    %659 = vmatprep.subr.mxu0 0.0
    %660 = vmatpush2.xpose.msra.mxu0 0.0
    %661 = vmatprep.subr.mxu0 0.0
    %662 = vmatpush2.xpose.msra.mxu0 0.0
    %663 = vmatprep.subr.mxu0 0.0
    %664 = vmatpush2.xpose.msra.mxu0 0.0
    %665 = vmatprep.subr.mxu0 0.0
    %666 = vmatpush2.xpose.msra.mxu0 0.0
    %667 = vmatprep.subr.mxu0 0.0
    %668 = vmatpush2.xpose.msra.mxu0 0.0
    %669 = vmatprep.subr.mxu0 0.0
    %670 = vmatpush2.xpose.msra.mxu0 0.0
    %671 = vmatprep.subr.mxu0 0.0
    %672 = vmatpush2.xpose.msra.mxu0 0.0
    %673 = vmatprep.subr.mxu0 0.0
    %674 = vmatpush2.xpose.msra.mxu0 0.0
    %675 = vmatprep.subr.mxu0 0.0
    %676 = vmatpush2.xpose.msra.mxu0 0.0
    %677 = vmatprep.mubr.f32.mxu0 0.0
    %678 = vmatmul.mubr.f32.gmra.mxu0 %v581
    %v679 = vpop.f32.mrf.mxu0
    %v680 = vadd.f32 %v548, %v679
    %v681 = vpop.f32.mrf.mxu0
    %682 = vmatprep.mubr.f32.mxu0 0.0
    %683 = vmatmul.mubr.f32.gmra.mxu0 %v583
    %v684 = vpop.f32.mrf.mxu0
    %v685 = vadd.f32 %v549, %v684
    %v686 = vpop.f32.mrf.mxu0
    %687 = vmatprep.mubr.f32.mxu0 0.0
    %688 = vmatmul.mubr.f32.gmra.mxu0 %v585
    %v689 = vpop.f32.mrf.mxu0
    %v690 = vadd.f32 %v550, %v689
    %v691 = vpop.f32.mrf.mxu0
    %692 = vmatprep.mubr.f32.mxu0 0.0
    %693 = vmatmul.mubr.f32.gmra.mxu0 %v587
    %v694 = vpop.f32.mrf.mxu0
    %v695 = vadd.f32 %v551, %v694
    %v696 = vpop.f32.mrf.mxu0
    %697 = vmatprep.mubr.f32.mxu0 0.0
    %698 = vmatmul.mubr.f32.gmra.mxu0 %v589
    %v699 = vpop.f32.mrf.mxu0
    %v700 = vadd.f32 %v552, %v699
    %v701 = vpop.f32.mrf.mxu0
    %702 = vmatprep.mubr.f32.mxu0 0.0
    %703 = vmatmul.mubr.f32.gmra.mxu0 %v591
    %v704 = vpop.f32.mrf.mxu0
    %v705 = vadd.f32 %v553, %v704
    %v706 = vpop.f32.mrf.mxu0
    %707 = vmatprep.mubr.f32.mxu0 0.0
    %708 = vmatmul.mubr.f32.gmra.mxu0 %v593
    %v709 = vpop.f32.mrf.mxu0
    %v710 = vadd.f32 %v554, %v709
    %v711 = vpop.f32.mrf.mxu0
    %712 = vmatprep.mubr.f32.mxu0 0.0
    %713 = vmatmul.mubr.f32.gmra.mxu0 %v595
    %v714 = vpop.f32.mrf.mxu0
    %v715 = vadd.f32 %v555, %v714
    %v716 = vpop.f32.mrf.mxu0
    %717 = vdwg.mxu0
    %vm718 = vcmask 523264
    %v719 = vsel %vm718, %v680, -inf
    %720 = vmax.xlane.f32.xlu0 %v719
    %v721 = vpop.xlane.xlu0 %720
    %v722 = vsel %vm718, %v685, -inf
    %723 = vmax.xlane.f32.xlu0 %v722
    %v724 = vpop.xlane.xlu0 %723
    %v725 = vsel %vm718, %v690, -inf
    %726 = vmax.xlane.f32.xlu0 %v725
    %v727 = vpop.xlane.xlu0 %726
    %v728 = vsel %vm718, %v695, -inf
    %729 = vmax.xlane.f32.xlu0 %v728
    %v730 = vpop.xlane.xlu0 %729
    %v731 = vsel %vm718, %v700, -inf
    %732 = vmax.xlane.f32.xlu0 %v731
    %v733 = vpop.xlane.xlu0 %732
    %v734 = vsel %vm718, %v705, -inf
    %735 = vmax.xlane.f32.xlu0 %v734
    %v736 = vpop.xlane.xlu0 %735
    %v737 = vsel %vm718, %v710, -inf
    %738 = vmax.xlane.f32.xlu0 %v737
    %v739 = vpop.xlane.xlu0 %738
    %v740 = vsel %vm718, %v715, -inf
    %741 = vmax.xlane.f32.xlu0 %v740
    %v742 = vpop.xlane.xlu0 %741
    %v743 = vsub.f32 %v680, %v721
    %v744 = vsub.f32 %v685, %v724
    %v745 = vsub.f32 %v690, %v727
    %v746 = vsub.f32 %v695, %v730
    %v747 = vsub.f32 %v700, %v733
    %v748 = vsub.f32 %v705, %v736
    %v749 = vsub.f32 %v710, %v739
    %v750 = vsub.f32 %v715, %v742
    %v751 = vmul.f32 %v743, 1.442695
    %v752 = vpow.pop %v751
    %v753 = vmul.f32 %v744, 1.442695
    %v754 = vpow.pop %v753
    %v755 = vmul.f32 %v745, 1.442695
    %v756 = vpow.pop %v755
    %v757 = vmul.f32 %v746, 1.442695
    %v758 = vpow.pop %v757
    %v759 = vmul.f32 %v747, 1.442695
    %v760 = vpow.pop %v759
    %v761 = vmul.f32 %v748, 1.442695
    %v762 = vpow.pop %v761
    %v763 = vmul.f32 %v749, 1.442695
    %v764 = vpow.pop %v763
    %v765 = vmul.f32 %v750, 1.442695
    %v766 = vpow.pop %v765
    %v767 = vsel %vm718, %v752, 0.0
    %768 = vadd.xlane.f32.xlu0 %v767
    %v769 = vpop.xlane.xlu0 %768
    %v770 = vsel %vm718, %v754, 0.0
    %771 = vadd.xlane.f32.xlu0 %v770
    %v772 = vpop.xlane.xlu0 %771
    %v773 = vsel %vm718, %v756, 0.0
    %774 = vadd.xlane.f32.xlu0 %v773
    %v775 = vpop.xlane.xlu0 %774
    %v776 = vsel %vm718, %v758, 0.0
    %777 = vadd.xlane.f32.xlu0 %v776
    %v778 = vpop.xlane.xlu0 %777
    %v779 = vsel %vm718, %v760, 0.0
    %780 = vadd.xlane.f32.xlu0 %v779
    %v781 = vpop.xlane.xlu0 %780
    %v782 = vsel %vm718, %v762, 0.0
    %783 = vadd.xlane.f32.xlu0 %v782
    %v784 = vpop.xlane.xlu0 %783
    %v785 = vsel %vm718, %v764, 0.0
    %786 = vadd.xlane.f32.xlu0 %v785
    %v787 = vpop.xlane.xlu0 %786
    %v788 = vsel %vm718, %v766, 0.0
    %789 = vadd.xlane.f32.xlu0 %v788
    %v790 = vpop.xlane.xlu0 %789
    %v791 = vrcp.pop %v769
    %v792 = vrcp.pop %v772
    %v793 = vrcp.pop %v775
    %v794 = vrcp.pop %v778
    %v795 = vrcp.pop %v781
    %v796 = vrcp.pop %v784
    %v797 = vrcp.pop %v787
    %v798 = vrcp.pop %v790
    %v799 = vmul.f32 %v752, %v791
    %v800 = vmul.f32 %v754, %v792
    %v801 = vmul.f32 %v756, %v793
    %v802 = vmul.f32 %v758, %v794
    %v803 = vmul.f32 %v760, %v795
    %v804 = vmul.f32 %v762, %v796
    %v805 = vmul.f32 %v764, %v797
    %v806 = vmul.f32 %v766, %v798
    %807 = vrot.lane.b32.xlu0 %v540, 112
    %v808 = vpop.permute.xlu0 %807
    %809 = vrot.lane.b32.xlu0 %v541, 112
    %v810 = vpop.permute.xlu0 %809
    %811 = vrot.lane.b32.xlu0 %v542, 112
    %v812 = vpop.permute.xlu0 %811
    %813 = vrot.lane.b32.xlu0 %v543, 112
    %v814 = vpop.permute.xlu0 %813
    %815 = vrot.lane.b32.xlu0 %v544, 112
    %v816 = vpop.permute.xlu0 %815
    %817 = vrot.lane.b32.xlu0 %v545, 112
    %v818 = vpop.permute.xlu0 %817
    %819 = vrot.lane.b32.xlu0 %v546, 112
    %v820 = vpop.permute.xlu0 %819
    %821 = vrot.lane.b32.xlu0 %v547, 112
    %v822 = vpop.permute.xlu0 %821
    %v832 = vsel %vm718, %v799, 0
    %v835 = vsel %vm718, %v800, 0
    %v838 = vsel %vm718, %v801, 0
    %v841 = vsel %vm718, %v802, 0
    %v844 = vsel %vm718, %v803, 0
    %v847 = vsel %vm718, %v804, 0
    %v850 = vsel %vm718, %v805, 0
    %v853 = vsel %vm718, %v806, 0
    %855 = vmatprep.subr.mxu0 0.0
    %856 = vmatpush1.msra.mxu0 0.0
    %857 = vmatprep.subr.mxu0 0.0
    %858 = vmatpush1.msra.mxu0 0.0
    %859 = vmatprep.subr.mxu0 0.0
    %860 = vmatpush1.msra.mxu0 0.0
    %861 = vmatprep.subr.mxu0 0.0
    %862 = vmatpush1.msra.mxu0 0.0
    %863 = vmatprep.subr.mxu0 0.0
    %864 = vmatpush1.msra.mxu0 0.0
    %865 = vmatprep.subr.mxu0 0.0
    %866 = vmatpush1.msra.mxu0 0.0
    %867 = vmatprep.subr.mxu0 0.0
    %868 = vmatpush1.msra.mxu0 0.0
    %869 = vmatprep.subr.mxu0 0.0
    %870 = vmatpush1.msra.mxu0 0.0
    %871 = vmatprep.subr.mxu0 0.0
    %872 = vmatpush1.msra.mxu0 %v822
    %873 = vmatprep.subr.mxu0 0.0
    %874 = vmatpush1.msra.mxu0 %v820
    %875 = vmatprep.subr.mxu0 0.0
    %876 = vmatpush1.msra.mxu0 %v818
    %877 = vmatprep.subr.mxu0 0.0
    %878 = vmatpush1.msra.mxu0 %v816
    %879 = vmatprep.subr.mxu0 0.0
    %880 = vmatpush1.msra.mxu0 %v814
    %881 = vmatprep.subr.mxu0 0.0
    %882 = vmatpush1.msra.mxu0 %v812
    %883 = vmatprep.subr.mxu0 0.0
    %884 = vmatpush1.msra.mxu0 %v810
    %885 = vmatprep.subr.mxu0 0.0
    %886 = vmatpush1.msra.mxu0 %v808
    %887 = vmatprep.subr.mxu0 0.0
    %888 = vmatpush2.msra.mxu0 0.0
    %889 = vmatprep.subr.mxu0 0.0
    %890 = vmatpush2.msra.mxu0 0.0
    %891 = vmatprep.subr.mxu0 0.0
    %892 = vmatpush2.msra.mxu0 0.0
    %893 = vmatprep.subr.mxu0 0.0
    %894 = vmatpush2.msra.mxu0 0.0
    %895 = vmatprep.subr.mxu0 0.0
    %896 = vmatpush2.msra.mxu0 0.0
    %897 = vmatprep.subr.mxu0 0.0
    %898 = vmatpush2.msra.mxu0 0.0
    %899 = vmatprep.subr.mxu0 0.0
    %900 = vmatpush2.msra.mxu0 0.0
    %901 = vmatprep.subr.mxu0 0.0
    %902 = vmatpush2.msra.mxu0 0.0
    %903 = vmatprep.subr.mxu0 0.0
    %904 = vmatpush2.msra.mxu0 0.0
    %905 = vmatprep.subr.mxu0 0.0
    %906 = vmatpush2.msra.mxu0 0.0
    %907 = vmatprep.subr.mxu0 0.0
    %908 = vmatpush2.msra.mxu0 0.0
    %909 = vmatprep.subr.mxu0 0.0
    %910 = vmatpush2.msra.mxu0 0.0
    %911 = vmatprep.subr.mxu0 0.0
    %912 = vmatpush2.msra.mxu0 0.0
    %913 = vmatprep.subr.mxu0 0.0
    %914 = vmatpush2.msra.mxu0 0.0
    %915 = vmatprep.subr.mxu0 0.0
    %916 = vmatpush2.msra.mxu0 0.0
    %917 = vmatprep.subr.mxu0 0.0
    %918 = vmatpush2.msra.mxu0 0.0
    %919 = vmatprep.mubr.f32.mxu0 0.0
    %920 = vmatmul.mubr.f32.gmra.mxu0 %v832
    %v921 = vpop.f32.mrf.mxu0
    %v922 = vadd.f32 0.0, %v921
    %v923 = vpop.f32.mrf.mxu0
    %924 = vmatprep.mubr.f32.mxu0 0.0
    %925 = vmatmul.mubr.f32.gmra.mxu0 %v835
    %v926 = vpop.f32.mrf.mxu0
    %v927 = vadd.f32 0.0, %v926
    %v928 = vpop.f32.mrf.mxu0
    %929 = vmatprep.mubr.f32.mxu0 0.0
    %930 = vmatmul.mubr.f32.gmra.mxu0 %v838
    %v931 = vpop.f32.mrf.mxu0
    %v932 = vadd.f32 0.0, %v931
    %v933 = vpop.f32.mrf.mxu0
    %934 = vmatprep.mubr.f32.mxu0 0.0
    %935 = vmatmul.mubr.f32.gmra.mxu0 %v841
    %v936 = vpop.f32.mrf.mxu0
    %v937 = vadd.f32 0.0, %v936
    %v938 = vpop.f32.mrf.mxu0
    %939 = vmatprep.mubr.f32.mxu0 0.0
    %940 = vmatmul.mubr.f32.gmra.mxu0 %v844
    %v941 = vpop.f32.mrf.mxu0
    %v942 = vadd.f32 0.0, %v941
    %v943 = vpop.f32.mrf.mxu0
    %944 = vmatprep.mubr.f32.mxu0 0.0
    %945 = vmatmul.mubr.f32.gmra.mxu0 %v847
    %v946 = vpop.f32.mrf.mxu0
    %v947 = vadd.f32 0.0, %v946
    %v948 = vpop.f32.mrf.mxu0
    %949 = vmatprep.mubr.f32.mxu0 0.0
    %950 = vmatmul.mubr.f32.gmra.mxu0 %v850
    %v951 = vpop.f32.mrf.mxu0
    %v952 = vadd.f32 0.0, %v951
    %v953 = vpop.f32.mrf.mxu0
    %954 = vmatprep.mubr.f32.mxu0 0.0
    %955 = vmatmul.mubr.f32.gmra.mxu0 %v853
    %v956 = vpop.f32.mrf.mxu0
    %v957 = vadd.f32 0.0, %v956
    %v958 = vpop.f32.mrf.mxu0
    %959 = vdwg.mxu0
    %v960 = vld [vmem:[%s7] sm:$0xff]
    %v962 = vsel %vm580, %v922, 0
    %v965 = vsel %vm580, %v927, 0
    %v968 = vsel %vm580, %v932, 0
    %v971 = vsel %vm580, %v937, 0
    %v974 = vsel %vm580, %v942, 0
    %v977 = vsel %vm580, %v947, 0
    %v980 = vsel %vm580, %v952, 0
    %v983 = vsel %vm580, %v957, 0
    %985 = vmatprep.subr.mxu0 0.0
    %986 = vmatpush1.msra.mxu0 0.0
    %987 = vmatprep.subr.mxu0 0.0
    %988 = vmatpush1.msra.mxu0 0.0
    %989 = vmatprep.subr.mxu0 0.0
    %990 = vmatpush1.msra.mxu0 0.0
    %991 = vmatprep.subr.mxu0 0.0
    %992 = vmatpush1.msra.mxu0 0.0
    %993 = vmatprep.subr.mxu0 0.0
    %994 = vmatpush1.msra.mxu0 0.0
    %995 = vmatprep.subr.mxu0 0.0
    %996 = vmatpush1.msra.mxu0 0.0
    %997 = vmatprep.subr.mxu0 0.0
    %998 = vmatpush1.msra.mxu0 0.0
    %999 = vmatprep.subr.mxu0 0.0
    %1000 = vmatpush1.msra.mxu0 0.0
    %1001 = vmatprep.subr.mxu0 0.0
    %1002 = vmatpush1.msra.mxu0 0.0
    %1003 = vmatprep.subr.mxu0 0.0
    %1004 = vmatpush1.msra.mxu0 0.0
    %1005 = vmatprep.subr.mxu0 0.0
    %1006 = vmatpush1.msra.mxu0 0.0
    %1007 = vmatprep.subr.mxu0 0.0
    %1008 = vmatpush1.msra.mxu0 0.0
    %1009 = vmatprep.subr.mxu0 0.0
    %1010 = vmatpush1.msra.mxu0 0.0
    %1011 = vmatprep.subr.mxu0 0.0
    %1012 = vmatpush1.msra.mxu0 0.0
    %1013 = vmatprep.subr.mxu0 0.0
    %1014 = vmatpush1.msra.mxu0 0.0
    %1015 = vmatprep.subr.mxu0 0.0
    %1016 = vmatpush1.msra.mxu0 %v960
    %1017 = vmatprep.subr.mxu0 0.0
    %1018 = vmatpush2.msra.mxu0 0.0
    %1019 = vmatprep.subr.mxu0 0.0
    %1020 = vmatpush2.msra.mxu0 0.0
    %1021 = vmatprep.subr.mxu0 0.0
    %1022 = vmatpush2.msra.mxu0 0.0
    %1023 = vmatprep.subr.mxu0 0.0
    %1024 = vmatpush2.msra.mxu0 0.0
    %1025 = vmatprep.subr.mxu0 0.0
    %1026 = vmatpush2.msra.mxu0 0.0
    %1027 = vmatprep.subr.mxu0 0.0
    %1028 = vmatpush2.msra.mxu0 0.0
    %1029 = vmatprep.subr.mxu0 0.0
    %1030 = vmatpush2.msra.mxu0 0.0
    %1031 = vmatprep.subr.mxu0 0.0
    %1032 = vmatpush2.msra.mxu0 0.0
    %1033 = vmatprep.subr.mxu0 0.0
    %1034 = vmatpush2.msra.mxu0 0.0
    %1035 = vmatprep.subr.mxu0 0.0
    %1036 = vmatpush2.msra.mxu0 0.0
    %1037 = vmatprep.subr.mxu0 0.0
    %1038 = vmatpush2.msra.mxu0 0.0
    %1039 = vmatprep.subr.mxu0 0.0
    %1040 = vmatpush2.msra.mxu0 0.0
    %1041 = vmatprep.subr.mxu0 0.0
    %1042 = vmatpush2.msra.mxu0 0.0
    %1043 = vmatprep.subr.mxu0 0.0
    %1044 = vmatpush2.msra.mxu0 0.0
    %1045 = vmatprep.subr.mxu0 0.0
    %1046 = vmatpush2.msra.mxu0 0.0
    %1047 = vmatprep.subr.mxu0 0.0
    %1048 = vmatpush2.msra.mxu0 0.0
    %1049 = vmatprep.mubr.f32.mxu0 0.0
    %1050 = vmatmul.mubr.f32.gmra.mxu0 %v962
    %v1051 = vpop.f32.mrf.mxu0
    %v1052 = vadd.f32 0.0, %v1051
    %v1053 = vpop.f32.mrf.mxu0
    %1054 = vmatprep.mubr.f32.mxu0 0.0
    %1055 = vmatmul.mubr.f32.gmra.mxu0 %v965
    %v1056 = vpop.f32.mrf.mxu0
    %v1057 = vadd.f32 0.0, %v1056
    %v1058 = vpop.f32.mrf.mxu0
    %1059 = vmatprep.mubr.f32.mxu0 0.0
    %1060 = vmatmul.mubr.f32.gmra.mxu0 %v968
    %v1061 = vpop.f32.mrf.mxu0
    %v1062 = vadd.f32 0.0, %v1061
    %v1063 = vpop.f32.mrf.mxu0
    %1064 = vmatprep.mubr.f32.mxu0 0.0
    %1065 = vmatmul.mubr.f32.gmra.mxu0 %v971
    %v1066 = vpop.f32.mrf.mxu0
    %v1067 = vadd.f32 0.0, %v1066
    %v1068 = vpop.f32.mrf.mxu0
    %1069 = vmatprep.mubr.f32.mxu0 0.0
    %1070 = vmatmul.mubr.f32.gmra.mxu0 %v974
    %v1071 = vpop.f32.mrf.mxu0
    %v1072 = vadd.f32 0.0, %v1071
    %v1073 = vpop.f32.mrf.mxu0
    %1074 = vmatprep.mubr.f32.mxu0 0.0
    %1075 = vmatmul.mubr.f32.gmra.mxu0 %v977
    %v1076 = vpop.f32.mrf.mxu0
    %v1077 = vadd.f32 0.0, %v1076
    %v1078 = vpop.f32.mrf.mxu0
    %1079 = vmatprep.mubr.f32.mxu0 0.0
    %1080 = vmatmul.mubr.f32.gmra.mxu0 %v980
    %v1081 = vpop.f32.mrf.mxu0
    %v1082 = vadd.f32 0.0, %v1081
    %v1083 = vpop.f32.mrf.mxu0
    %1084 = vmatprep.mubr.f32.mxu0 0.0
    %1085 = vmatmul.mubr.f32.gmra.mxu0 %v983
    %v1086 = vpop.f32.mrf.mxu0
    %v1087 = vadd.f32 0.0, %v1086
    %v1088 = vpop.f32.mrf.mxu0
    %1089 = vdwg.mxu0
    %v1090 = vld [vmem:[%s8] sm:$0xff]
    %v1091 = vld [vmem:[%s8 + $0x8] sm:$0xff]
    %v1092 = vld [vmem:[%s8 + $0x10] sm:$0xff]
    %v1093 = vld [vmem:[%s8 + $0x18] sm:$0xff]
    %v1094 = vld [vmem:[%s8 + $0x20] sm:$0xff]
    %v1095 = vld [vmem:[%s8 + $0x28] sm:$0xff]
    %v1096 = vld [vmem:[%s8 + $0x30] sm:$0xff]
    %v1097 = vld [vmem:[%s8 + $0x38] sm:$0xff]
    %v1098 = vmul.f32 %v1052, %v1090
    %v1099 = vmul.f32 %v1057, %v1091
    %v1100 = vmul.f32 %v1062, %v1092
    %v1101 = vmul.f32 %v1067, %v1093
    %v1102 = vmul.f32 %v1072, %v1094
    %v1103 = vmul.f32 %v1077, %v1095
    %v1104 = vmul.f32 %v1082, %v1096
    %v1105 = vmul.f32 %v1087, %v1097
    %1114 = vrot.lane.b32.xlu0 %v1098, 96
    %v1115 = vpop.permute.xlu0 %1114
    %1116 = vrot.lane.b32.xlu0 %v1099, 96
    %v1117 = vpop.permute.xlu0 %1116
    %1118 = vrot.lane.b32.xlu0 %v1100, 96
    %v1119 = vpop.permute.xlu0 %1118
    %1120 = vrot.lane.b32.xlu0 %v1101, 96
    %v1121 = vpop.permute.xlu0 %1120
    %1122 = vrot.lane.b32.xlu0 %v1102, 96
    %v1123 = vpop.permute.xlu0 %1122
    %1124 = vrot.lane.b32.xlu0 %v1103, 96
    %v1125 = vpop.permute.xlu0 %1124
    %1126 = vrot.lane.b32.xlu0 %v1104, 96
    %v1127 = vpop.permute.xlu0 %1126
    %1128 = vrot.lane.b32.xlu0 %v1105, 96
    %v1129 = vpop.permute.xlu0 %1128
    %v1138 = vadd.f32 %v1098, %v1115
    %v1139 = vadd.f32 %v1099, %v1117
    %v1140 = vadd.f32 %v1100, %v1119
    %v1141 = vadd.f32 %v1101, %v1121
    %v1142 = vadd.f32 %v1102, %v1123
    %v1143 = vadd.f32 %v1103, %v1125
    %v1144 = vadd.f32 %v1104, %v1127
    %v1145 = vadd.f32 %v1105, %v1129
    %1146 = vrot.lane.b32.xlu0 %v1098, 64
    %v1147 = vpop.permute.xlu0 %1146
    %1148 = vrot.lane.b32.xlu0 %v1099, 64
    %v1149 = vpop.permute.xlu0 %1148
    %1150 = vrot.lane.b32.xlu0 %v1100, 64
    %v1151 = vpop.permute.xlu0 %1150
    %1152 = vrot.lane.b32.xlu0 %v1101, 64
    %v1153 = vpop.permute.xlu0 %1152
    %1154 = vrot.lane.b32.xlu0 %v1102, 64
    %v1155 = vpop.permute.xlu0 %1154
    %1156 = vrot.lane.b32.xlu0 %v1103, 64
    %v1157 = vpop.permute.xlu0 %1156
    %1158 = vrot.lane.b32.xlu0 %v1104, 64
    %v1159 = vpop.permute.xlu0 %1158
    %1160 = vrot.lane.b32.xlu0 %v1105, 64
    %v1161 = vpop.permute.xlu0 %1160
    %v1170 = vadd.f32 %v1138, %v1147
    %v1171 = vadd.f32 %v1139, %v1149
    %v1172 = vadd.f32 %v1140, %v1151
    %v1173 = vadd.f32 %v1141, %v1153
    %v1174 = vadd.f32 %v1142, %v1155
    %v1175 = vadd.f32 %v1143, %v1157
    %v1176 = vadd.f32 %v1144, %v1159
    %v1177 = vadd.f32 %v1145, %v1161
    %1178 = vrot.lane.b32.xlu0 %v1098, 32
    %v1179 = vpop.permute.xlu0 %1178
    %1180 = vrot.lane.b32.xlu0 %v1099, 32
    %v1181 = vpop.permute.xlu0 %1180
    %1182 = vrot.lane.b32.xlu0 %v1100, 32
    %v1183 = vpop.permute.xlu0 %1182
    %1184 = vrot.lane.b32.xlu0 %v1101, 32
    %v1185 = vpop.permute.xlu0 %1184
    %1186 = vrot.lane.b32.xlu0 %v1102, 32
    %v1187 = vpop.permute.xlu0 %1186
    %1188 = vrot.lane.b32.xlu0 %v1103, 32
    %v1189 = vpop.permute.xlu0 %1188
    %1190 = vrot.lane.b32.xlu0 %v1104, 32
    %v1191 = vpop.permute.xlu0 %1190
    %1192 = vrot.lane.b32.xlu0 %v1105, 32
    %v1193 = vpop.permute.xlu0 %1192
    %v1202 = vadd.f32 %v1170, %v1179
    %v1203 = vadd.f32 %v1171, %v1181
    %v1204 = vadd.f32 %v1172, %v1183
    %v1205 = vadd.f32 %v1173, %v1185
    %v1206 = vadd.f32 %v1174, %v1187
    %v1207 = vadd.f32 %v1175, %v1189
    %v1208 = vadd.f32 %v1176, %v1191
    %v1209 = vadd.f32 %v1177, %v1193
    %v1210 = vld [vmem:[#allocation5] sm:$0xff]
    %v1211 = vld [vmem:[#allocation5 + $0x8] sm:$0xff]
    %v1212 = vld [vmem:[#allocation8] sm:$0x1]
    %v1214 = vlaneseq
    %v1215 = vshrl.u32 %v1214, 7
    %v1216 = vsub.s32 0, %v1215
    %v1217 = vrot.slane %v1212, %v1216
    %v1220 = vsel %vm718, %v1210, 0
    %v1223 = vsel %vm718, %v1211, 0
    %1225 = vmatprep.subr.mxu0 0.0
    %1226 = vmatpush1.msra.mxu0 0.0
    %1227 = vmatprep.subr.mxu0 0.0
    %1228 = vmatpush1.msra.mxu0 0.0
    %1229 = vmatprep.subr.mxu0 0.0
    %1230 = vmatpush1.msra.mxu0 0.0
    %1231 = vmatprep.subr.mxu0 0.0
    %1232 = vmatpush1.msra.mxu0 0.0
    %1233 = vmatprep.subr.mxu0 0.0
    %1234 = vmatpush1.msra.mxu0 0.0
    %1235 = vmatprep.subr.mxu0 0.0
    %1236 = vmatpush1.msra.mxu0 0.0
    %1237 = vmatprep.subr.mxu0 0.0
    %1238 = vmatpush1.msra.mxu0 0.0
    %1239 = vmatprep.subr.mxu0 0.0
    %1240 = vmatpush1.msra.mxu0 0.0
    %1241 = vmatprep.subr.mxu0 0.0
    %1242 = vmatpush1.msra.mxu0 %v1209
    %1243 = vmatprep.subr.mxu0 0.0
    %1244 = vmatpush1.msra.mxu0 %v1208
    %1245 = vmatprep.subr.mxu0 0.0
    %1246 = vmatpush1.msra.mxu0 %v1207
    %1247 = vmatprep.subr.mxu0 0.0
    %1248 = vmatpush1.msra.mxu0 %v1206
    %1249 = vmatprep.subr.mxu0 0.0
    %1250 = vmatpush1.msra.mxu0 %v1205
    %1251 = vmatprep.subr.mxu0 0.0
    %1252 = vmatpush1.msra.mxu0 %v1204
    %1253 = vmatprep.subr.mxu0 0.0
    %1254 = vmatpush1.msra.mxu0 %v1203
    %1255 = vmatprep.subr.mxu0 0.0
    %1256 = vmatpush1.msra.mxu0 %v1202
    %1257 = vmatprep.subr.mxu0 0.0
    %1258 = vmatpush2.msra.mxu0 0.0
    %1259 = vmatprep.subr.mxu0 0.0
    %1260 = vmatpush2.msra.mxu0 0.0
    %1261 = vmatprep.subr.mxu0 0.0
    %1262 = vmatpush2.msra.mxu0 0.0
    %1263 = vmatprep.subr.mxu0 0.0
    %1264 = vmatpush2.msra.mxu0 0.0
    %1265 = vmatprep.subr.mxu0 0.0
    %1266 = vmatpush2.msra.mxu0 0.0
    %1267 = vmatprep.subr.mxu0 0.0
    %1268 = vmatpush2.msra.mxu0 0.0
    %1269 = vmatprep.subr.mxu0 0.0
    %1270 = vmatpush2.msra.mxu0 0.0
    %1271 = vmatprep.subr.mxu0 0.0
    %1272 = vmatpush2.msra.mxu0 0.0
    %1273 = vmatprep.subr.mxu0 0.0
    %1274 = vmatpush2.msra.mxu0 0.0
    %1275 = vmatprep.subr.mxu0 0.0
    %1276 = vmatpush2.msra.mxu0 0.0
    %1277 = vmatprep.subr.mxu0 0.0
    %1278 = vmatpush2.msra.mxu0 0.0
    %1279 = vmatprep.subr.mxu0 0.0
    %1280 = vmatpush2.msra.mxu0 0.0
    %1281 = vmatprep.subr.mxu0 0.0
    %1282 = vmatpush2.msra.mxu0 0.0
    %1283 = vmatprep.subr.mxu0 0.0
    %1284 = vmatpush2.msra.mxu0 0.0
    %1285 = vmatprep.subr.mxu0 0.0
    %1286 = vmatpush2.msra.mxu0 0.0
    %1287 = vmatprep.subr.mxu0 0.0
    %1288 = vmatpush2.msra.mxu0 0.0
    %1289 = vmatprep.mubr.f32.mxu0 0.0
    %1290 = vmatmul.mubr.f32.gmra.mxu0 %v1220
    %v1291 = vpop.f32.mrf.mxu0
    %v1292 = vadd.f32 %v1217, %v1291
    %v1293 = vpop.f32.mrf.mxu0
    %1294 = vmatprep.mubr.f32.mxu0 0.0
    %1295 = vmatmul.mubr.f32.gmra.mxu0 %v1223
    %v1296 = vpop.f32.mrf.mxu0
    %v1297 = vadd.f32 %v1217, %v1296
    %v1298 = vpop.f32.mrf.mxu0
    %1299 = vdwg.mxu0
    %v1300 = vadd.f32 %v1292, %v195
    %v1301 = vadd.f32 %v1297, %v196
    %v1302 = vsel %vm201, %v1300, 0.0
    %v1303 = vsel %vm201, %v1301, 0.0
    %v1304 = vadd.f32 %v1302, %v1303
    %v1305 = vrot.slane %v1304, 4
    %v1306 = vadd.f32 %v1304, %v1305
    %v1307 = vrot.slane %v1306, 2
    %v1308 = vadd.f32 %v1306, %v1307
    %v1309 = vrot.slane %v1308, 1
    %v1310 = vadd.f32 %v1308, %v1309
    %v1311 = vmul.f32 %v1310, 0.0625
    %v1312 = vmul.f32 %v1300, %v1300
    %v1313 = vmul.f32 %v1301, %v1301
    %v1314 = vsel %vm201, %v1312, 0.0
    %v1315 = vsel %vm201, %v1313, 0.0
    %v1316 = vadd.f32 %v1314, %v1315
    %v1317 = vrot.slane %v1316, 4
    %v1318 = vadd.f32 %v1316, %v1317
    %v1319 = vrot.slane %v1318, 2
    %v1320 = vadd.f32 %v1318, %v1319
    %v1321 = vrot.slane %v1320, 1
    %v1322 = vadd.f32 %v1320, %v1321
    %v1323 = vmul.f32 %v1322, 0.0625
    %v1324 = vmul.f32 %v1311, %v1311
    %v1325 = vsub.f32 %v1323, %v1324
    %v1326 = vsub.f32 %v1300, %v1311
    %v1327 = vsub.f32 %v1301, %v1311
    %v1328 = vadd.f32 %v1325, 1e-05
    %v1329 = vrsqrt.pop %v1328
    %v1330 = vmul.f32 %v1326, %v1329
    %v1331 = vmul.f32 %v1327, %v1329
    %v1332 = vld [vmem:[#allocation10] sm:$0x1]
    %v1334 = vlaneseq
    %v1335 = vshrl.u32 %v1334, 7
    %v1336 = vsub.s32 0, %v1335
    %v1337 = vrot.slane %v1332, %v1336
    %v1339 = vmul.f32 %v1330, %v1337
    %v1340 = vmul.f32 %v1331, %v1337
    %v1341 = vld [vmem:[#allocation11] sm:$0x1]
    %v1343 = vlaneseq
    %v1344 = vshrl.u32 %v1343, 7
    %v1345 = vsub.s32 0, %v1344
    %v1346 = vrot.slane %v1341, %v1345
    %v1348 = vadd.f32 %v1339, %v1346
    %v1349 = vadd.f32 %v1340, %v1346
    %v1350 = vld [vmem:[#allocation13] sm:$0xff]
    %v1351 = vld [vmem:[#allocation13 + $0x8] sm:$0xff]
    %v1352 = vld [vmem:[#allocation13 + $0x10] sm:$0xff]
    %v1353 = vld [vmem:[#allocation13 + $0x18] sm:$0xff]
    %v1354 = vld [vmem:[#allocation14] sm:$0x1]
    %v1356 = vlaneseq
    %v1357 = vshrl.u32 %v1356, 7
    %v1358 = vsub.s32 0, %v1357
    %v1359 = vrot.slane %v1354, %v1358
    %v1362 = vsel %vm201, %v1348, 0
    %v1365 = vsel %vm201, %v1349, 0
    %1367 = vmatprep.subr.mxu0 0.0
    %1368 = vmatpush1.msra.mxu0 0.0
    %1369 = vmatprep.subr.mxu0 0.0
    %1370 = vmatpush1.msra.mxu0 0.0
    %1371 = vmatprep.subr.mxu0 0.0
    %1372 = vmatpush1.msra.mxu0 0.0
    %1373 = vmatprep.subr.mxu0 0.0
    %1374 = vmatpush1.msra.mxu0 0.0
    %1375 = vmatprep.subr.mxu0 0.0
    %1376 = vmatpush1.msra.mxu0 0.0
    %1377 = vmatprep.subr.mxu0 0.0
    %1378 = vmatpush1.msra.mxu0 0.0
    %1379 = vmatprep.subr.mxu0 0.0
    %1380 = vmatpush1.msra.mxu0 0.0
    %1381 = vmatprep.subr.mxu0 0.0
    %1382 = vmatpush1.msra.mxu0 0.0
    %1383 = vmatprep.subr.mxu0 0.0
    %1384 = vmatpush1.msra.mxu0 0.0
    %1385 = vmatprep.subr.mxu0 0.0
    %1386 = vmatpush1.msra.mxu0 0.0
    %1387 = vmatprep.subr.mxu0 0.0
    %1388 = vmatpush1.msra.mxu0 0.0
    %1389 = vmatprep.subr.mxu0 0.0
    %1390 = vmatpush1.msra.mxu0 0.0
    %1391 = vmatprep.subr.mxu0 0.0
    %1392 = vmatpush1.msra.mxu0 %v1353
    %1393 = vmatprep.subr.mxu0 0.0
    %1394 = vmatpush1.msra.mxu0 %v1352
    %1395 = vmatprep.subr.mxu0 0.0
    %1396 = vmatpush1.msra.mxu0 %v1351
    %1397 = vmatprep.subr.mxu0 0.0
    %1398 = vmatpush1.msra.mxu0 %v1350
    %1399 = vmatprep.subr.mxu0 0.0
    %1400 = vmatpush2.msra.mxu0 0.0
    %1401 = vmatprep.subr.mxu0 0.0
    %1402 = vmatpush2.msra.mxu0 0.0
    %1403 = vmatprep.subr.mxu0 0.0
    %1404 = vmatpush2.msra.mxu0 0.0
    %1405 = vmatprep.subr.mxu0 0.0
    %1406 = vmatpush2.msra.mxu0 0.0
    %1407 = vmatprep.subr.mxu0 0.0
    %1408 = vmatpush2.msra.mxu0 0.0
    %1409 = vmatprep.subr.mxu0 0.0
    %1410 = vmatpush2.msra.mxu0 0.0
    %1411 = vmatprep.subr.mxu0 0.0
    %1412 = vmatpush2.msra.mxu0 0.0
    %1413 = vmatprep.subr.mxu0 0.0
    %1414 = vmatpush2.msra.mxu0 0.0
    %1415 = vmatprep.subr.mxu0 0.0
    %1416 = vmatpush2.msra.mxu0 0.0
    %1417 = vmatprep.subr.mxu0 0.0
    %1418 = vmatpush2.msra.mxu0 0.0
    %1419 = vmatprep.subr.mxu0 0.0
    %1420 = vmatpush2.msra.mxu0 0.0
    %1421 = vmatprep.subr.mxu0 0.0
    %1422 = vmatpush2.msra.mxu0 0.0
    %1423 = vmatprep.subr.mxu0 0.0
    %1424 = vmatpush2.msra.mxu0 0.0
    %1425 = vmatprep.subr.mxu0 0.0
    %1426 = vmatpush2.msra.mxu0 0.0
    %1427 = vmatprep.subr.mxu0 0.0
    %1428 = vmatpush2.msra.mxu0 0.0
    %1429 = vmatprep.subr.mxu0 0.0
    %1430 = vmatpush2.msra.mxu0 0.0
    %1431 = vmatprep.mubr.f32.mxu0 0.0
    %1432 = vmatmul.mubr.f32.gmra.mxu0 %v1362
    %v1433 = vpop.f32.mrf.mxu0
    %v1434 = vadd.f32 %v1359, %v1433
    %v1435 = vpop.f32.mrf.mxu0
    %1436 = vmatprep.mubr.f32.mxu0 0.0
    %1437 = vmatmul.mubr.f32.gmra.mxu0 %v1365
    %v1438 = vpop.f32.mrf.mxu0
    %v1439 = vadd.f32 %v1359, %v1438
    %v1440 = vpop.f32.mrf.mxu0
    %1441 = vdwg.mxu0
    %v1442 = vmax.f32 %v1434, 0.0
    %v1443 = vmax.f32 %v1439, 0.0
    %v1444 = vld [vmem:[%s14] sm:$0xff]
    %v1445 = vld [vmem:[%s14 + $0x8] sm:$0xff]
    %v1446 = vld [vmem:[%s14 + $0x10] sm:$0xff]
    %v1447 = vld [vmem:[%s14 + $0x18] sm:$0xff]
    %v1448 = vld [vmem:[%s14 + $0x20] sm:$0xff]
    %v1449 = vld [vmem:[%s14 + $0x28] sm:$0xff]
    %v1450 = vld [vmem:[%s14 + $0x30] sm:$0xff]
    %v1451 = vld [vmem:[%s14 + $0x38] sm:$0xff]
    %v1452 = vld [vmem:[#allocation16] sm:$0x1]
    %v1454 = vlaneseq
    %v1455 = vshrl.u32 %v1454, 7
    %v1456 = vsub.s32 0, %v1455
    %v1457 = vrot.slane %v1452, %v1456
    %v1460 = vsel %vm718, %v1442, 0
    %v1463 = vsel %vm718, %v1443, 0
    %1465 = vmatprep.subr.mxu0 0.0
    %1466 = vmatpush1.msra.mxu0 0.0
    %1467 = vmatprep.subr.mxu0 0.0
    %1468 = vmatpush1.msra.mxu0 0.0
    %1469 = vmatprep.subr.mxu0 0.0
    %1470 = vmatpush1.msra.mxu0 0.0
    %1471 = vmatprep.subr.mxu0 0.0
    %1472 = vmatpush1.msra.mxu0 0.0
    %1473 = vmatprep.subr.mxu0 0.0
    %1474 = vmatpush1.msra.mxu0 0.0
    %1475 = vmatprep.subr.mxu0 0.0
    %1476 = vmatpush1.msra.mxu0 0.0
    %1477 = vmatprep.subr.mxu0 0.0
    %1478 = vmatpush1.msra.mxu0 0.0
    %1479 = vmatprep.subr.mxu0 0.0
    %1480 = vmatpush1.msra.mxu0 0.0
    %1481 = vmatprep.subr.mxu0 0.0
    %1482 = vmatpush1.msra.mxu0 %v1451
    %1483 = vmatprep.subr.mxu0 0.0
    %1484 = vmatpush1.msra.mxu0 %v1450
    %1485 = vmatprep.subr.mxu0 0.0
    %1486 = vmatpush1.msra.mxu0 %v1449
    %1487 = vmatprep.subr.mxu0 0.0
    %1488 = vmatpush1.msra.mxu0 %v1448
    %1489 = vmatprep.subr.mxu0 0.0
    %1490 = vmatpush1.msra.mxu0 %v1447
    %1491 = vmatprep.subr.mxu0 0.0
    %1492 = vmatpush1.msra.mxu0 %v1446
    %1493 = vmatprep.subr.mxu0 0.0
    %1494 = vmatpush1.msra.mxu0 %v1445
    %1495 = vmatprep.subr.mxu0 0.0
    %1496 = vmatpush1.msra.mxu0 %v1444
    %1497 = vmatprep.subr.mxu0 0.0
    %1498 = vmatpush2.msra.mxu0 0.0
    %1499 = vmatprep.subr.mxu0 0.0
    %1500 = vmatpush2.msra.mxu0 0.0
    %1501 = vmatprep.subr.mxu0 0.0
    %1502 = vmatpush2.msra.mxu0 0.0
    %1503 = vmatprep.subr.mxu0 0.0
    %1504 = vmatpush2.msra.mxu0 0.0
    %1505 = vmatprep.subr.mxu0 0.0
    %1506 = vmatpush2.msra.mxu0 0.0
    %1507 = vmatprep.subr.mxu0 0.0
    %1508 = vmatpush2.msra.mxu0 0.0
    %1509 = vmatprep.subr.mxu0 0.0
    %1510 = vmatpush2.msra.mxu0 0.0
    %1511 = vmatprep.subr.mxu0 0.0
    %1512 = vmatpush2.msra.mxu0 0.0
    %1513 = vmatprep.subr.mxu0 0.0
    %1514 = vmatpush2.msra.mxu0 0.0
    %1515 = vmatprep.subr.mxu0 0.0
    %1516 = vmatpush2.msra.mxu0 0.0
    %1517 = vmatprep.subr.mxu0 0.0
    %1518 = vmatpush2.msra.mxu0 0.0
    %1519 = vmatprep.subr.mxu0 0.0
    %1520 = vmatpush2.msra.mxu0 0.0
    %1521 = vmatprep.subr.mxu0 0.0
    %1522 = vmatpush2.msra.mxu0 0.0
    %1523 = vmatprep.subr.mxu0 0.0
    %1524 = vmatpush2.msra.mxu0 0.0
    %1525 = vmatprep.subr.mxu0 0.0
    %1526 = vmatpush2.msra.mxu0 0.0
    %1527 = vmatprep.subr.mxu0 0.0
    %1528 = vmatpush2.msra.mxu0 0.0
    %1529 = vmatprep.mubr.f32.mxu0 0.0
    %1530 = vmatmul.mubr.f32.gmra.mxu0 %v1460
    %v1531 = vpop.f32.mrf.mxu0
    %v1532 = vadd.f32 %v1457, %v1531
    %v1533 = vpop.f32.mrf.mxu0
    %1534 = vmatprep.mubr.f32.mxu0 0.0
    %1535 = vmatmul.mubr.f32.gmra.mxu0 %v1463
    %v1536 = vpop.f32.mrf.mxu0
    %v1537 = vadd.f32 %v1457, %v1536
    %v1538 = vpop.f32.mrf.mxu0
    %1539 = vdwg.mxu0
    %v1540 = vadd.f32 %v1532, %v1348
    %v1541 = vadd.f32 %v1537, %v1349
    %v1542 = vsel %vm201, %v1540, 0.0
    %v1543 = vsel %vm201, %v1541, 0.0
    %v1544 = vadd.f32 %v1542, %v1543
    %v1545 = vrot.slane %v1544, 4
    %v1546 = vadd.f32 %v1544, %v1545
    %v1547 = vrot.slane %v1546, 2
    %v1548 = vadd.f32 %v1546, %v1547
    %v1549 = vrot.slane %v1548, 1
    %v1550 = vadd.f32 %v1548, %v1549
    %v1551 = vmul.f32 %v1550, 0.0625
    %v1552 = vmul.f32 %v1540, %v1540
    %v1553 = vmul.f32 %v1541, %v1541
    %v1554 = vsel %vm201, %v1552, 0.0
    %v1555 = vsel %vm201, %v1553, 0.0
    %v1556 = vadd.f32 %v1554, %v1555
    %v1557 = vrot.slane %v1556, 4
    %v1558 = vadd.f32 %v1556, %v1557
    %v1559 = vrot.slane %v1558, 2
    %v1560 = vadd.f32 %v1558, %v1559
    %v1561 = vrot.slane %v1560, 1
    %v1562 = vadd.f32 %v1560, %v1561
    %v1563 = vmul.f32 %v1562, 0.0625
    %v1564 = vmul.f32 %v1551, %v1551
    %v1565 = vsub.f32 %v1563, %v1564
    %v1566 = vsub.f32 %v1540, %v1551
    %v1567 = vsub.f32 %v1541, %v1551
    %v1568 = vadd.f32 %v1565, 1e-05
    %v1569 = vrsqrt.pop %v1568
    %v1570 = vmul.f32 %v1566, %v1569
    %v1571 = vmul.f32 %v1567, %v1569
    %v1572 = vld [vmem:[#allocation17] sm:$0x1]
    %v1574 = vlaneseq
    %v1575 = vshrl.u32 %v1574, 7
    %v1576 = vsub.s32 0, %v1575
    %v1577 = vrot.slane %v1572, %v1576
    %v1579 = vmul.f32 %v1570, %v1577
    %v1580 = vmul.f32 %v1571, %v1577
    %v1581 = vld [vmem:[#allocation19] sm:$0x1]
    %v1583 = vlaneseq
    %v1584 = vshrl.u32 %v1583, 7
    %v1585 = vsub.s32 0, %v1584
    %v1586 = vrot.slane %v1581, %v1585
    %v1588 = vadd.f32 %v1579, %v1586
    %v1589 = vadd.f32 %v1580, %v1586
    %1590 = vst.msk [vmem:[#allocation20] sm:$0xff] %vm201, %v1588
    %1591 = vst.msk [vmem:[#allocation20 + $0x8] sm:$0xff] %vm201, %v1589
    // Predicated region
    $region118: #{encoder_forward.1} parent=1 // pred_check
      _
    $region119: #{encoder_forward.1} parent=1 // pred_check_branch
      %1593 = sbr.rel (0) target = $region121
    $region120: #{encoder_forward.1} parent=1 // pred_region
      %s1595 = ssub.s32 256, 256
      %1596 = vsyncadd [#allocation4], %s1595
      %s1597 = sshll.u32 [#allocation20], 4
      %s1598 = int_to_ptr.vmem [resolvable:$true] %s1597
      %1603 = dma.vmem_to_hbm [thread:$0]  %s1598, 256, %s18, [#allocation4], 128, 128, 8
    $region121: #{encoder_forward.1} parent=1 // pred_fallthru
      _
    // Predicated region
    $region122: #{encoder_forward.1} parent=1 // pred_check
      _
    $region123: #{encoder_forward.1} parent=1 // pred_check_branch
      %1605 = sbr.rel (0) target = $region125
    $region124: #{encoder_forward.1} parent=1 // pred_region
      %1606 = dma.done [#allocation4], 256
    $region125: #{encoder_forward.1} parent=1 // pred_fallthru
      _
    %1607 = vsyncpa [#allocation3], 1
    %1608 = vsyncpa [#allocation6], 1
    %1609 = vsyncpa [#allocation9], 1
    %1610 = vsyncpa [#allocation12], 1
    %1611 = vsyncpa [#allocation15], 1
    %1612 = vsyncpa [#allocation18], 1
    %1613 = vsyncpa [#allocation4], 1

</llo_original>
